<compile_context>
chip_gen: v7x
topology: tpu7x:2x2x1
jax: 0.10.0
libtpu: 0.0.40
codegen_flags: <defaults>
</compile_context>

<pallas_src>
import jax
import jax.numpy as jnp
from jax import lax
from jax.experimental import pallas as pl
from jax.experimental.pallas import tpu as pltpu


def _round_up(a, b):
    return (a + b - 1) // b * b


def _pick_tile_h(Ho, Wo, N):
    """Largest TH dividing Ho with TH*Wo <= ~2048 rows, TH*Wo % 8 == 0 (or TH == Ho).

    If N == 1, prefer >= 2 row blocks so both v7x TensorCores get work."""
    target_rows = 2048
    cands = [th for th in range(1, Ho + 1)
             if Ho % th == 0 and (th == Ho or (th * Wo) % 8 == 0)]
    fit = [th for th in cands if th * Wo <= target_rows]
    th = max(fit) if fit else min(cands)
    if N == 1:
        two = [t for t in cands if Ho // t >= 2 and t * Wo <= target_rows]
        if two:
            th = max(two)
    return th


def _make_fused_kernel(K, dil, TH, Wo):
    """Kernel: gather K*K dilated taps from the VMEM image, one MXU dot, BN shift, ReLU."""

    def kernel(x_ref, w_ref, shift_ref, o_ref):
        # x_ref:     (Hp, Wp, CIN)    bf16 padded image of the current batch element
        # w_ref:     (K*K*CIN, COUT)  bf16, BN-scale already folded in
        # shift_ref: (1, COUT)        f32 folded BN shift
        # o_ref:     (TH*Wo, COUT)    f32 output tile (COUT lane-dense)
        r = pl.program_id(1)
        h0 = pl.multiple_of(r * TH, TH)

        pieces = []
        for kh in range(K):
            # Dynamic slice on the leading (row) axis only; minor dims untouched.
            slab = x_ref[pl.ds(h0 + kh * dil, TH), :, :]          # (TH, Wp, CIN)
            for kw in range(K):
                pieces.append(slab[:, kw * dil:kw * dil + Wo, :])  # (TH, Wo, CIN)
        patch = jnp.concatenate(pieces, axis=-1) if len(pieces) > 1 else pieces[0]
        lhs = patch.reshape(TH * Wo, -1)                           # (TH*Wo, K*K*CIN)

        y = jnp.dot(lhs, w_ref[...], preferred_element_type=jnp.float32)
        y = y + shift_ref[...]                                     # f32 epilogue
        o_ref[...] = jnp.maximum(y, 0.0).astype(o_ref.dtype)

    return kernel


def atrous_convolution(x_nchw, weight, gamma, beta, running_mean, running_var,
                       *, pad, dilation, eps=1e-5):
    """Forward pass of Atrous_Convolution.

    x_nchw:  (N, Cin, H, W)           float32
    weight:  (Cout, Cin, K, K)        float32   (PyTorch Conv2d layout, bias=False)
    gamma, beta, running_mean, running_var: (Cout,)
    Returns: (N, Cout, H_out, W_out)  float32
    """
    N, CIN, H, W = x_nchw.shape
    COUT, _, K, _ = weight.shape

    Ho = H + 2 * pad - dilation * (K - 1)
    Wo = W + 2 * pad - dilation * (K - 1)
    Hp, Wp = H + 2 * pad, W + 2 * pad
    KKC = K * K * CIN

    # ---- JAX glue (single pass over the small input; no HBM im2col copy) ----
    x_nhwc = jnp.transpose(x_nchw, (0, 2, 3, 1))                       # (N, H, W, Cin)
    xp = jnp.pad(x_nhwc, ((0, 0), (pad, pad), (pad, pad), (0, 0)))     # (N, Hp, Wp, Cin)
    xp = xp.astype(jnp.bfloat16)

    # Fold eval-mode BN into the conv weights; shift stays as a bias.
    inv_std = lax.rsqrt(running_var + eps)
    scale = gamma * inv_std                                            # (COUT,)
    shift = (beta - running_mean * scale).reshape(1, COUT).astype(jnp.float32)
    # (Cout, Cin, K, K) -> (K, K, Cin, Cout) -> (K*K*Cin, Cout); fold, then cast.
    w_flat = jnp.transpose(weight, (2, 3, 1, 0)).reshape(KKC, COUT)
    w_folded = (w_flat * scale[None, :]).astype(jnp.bfloat16)

    TH = _pick_tile_h(Ho, Wo, N)
    n_row_blocks = Ho // TH

    # Right-sized VMEM limit: per-step footprint in (8,128)-tiled layout, double
    # buffered, plus in-kernel temporaries, with generous (4x) headroom.
    def _tile_bytes(rows, cols, itemsize):
        return _round_up(rows, 8) * _round_up(cols, 128) * itemsize
    est = 2 * (Hp * _tile_bytes(Wp, CIN, 2)            # bf16 image block
               + _tile_bytes(KKC, COUT, 2)             # bf16 folded weight
               + _tile_bytes(1, COUT, 4)               # f32 shift
               + _tile_bytes(TH * Wo, COUT, 4))        # f32 output tile
    est += 2 * _tile_bytes(TH * Wo, KKC, 4) + _tile_bytes(TH * Wo, COUT, 4)
    vmem_limit = int(min(max(4 * est, 16 * 1024 * 1024), 64 * 1024 * 1024))

    out_flat = pl.pallas_call(
        _make_fused_kernel(K, dilation, TH, Wo),
        out_shape=jax.ShapeDtypeStruct((N, Ho * Wo, COUT), jnp.float32),
        grid_spec=pltpu.PrefetchScalarGridSpec(
            num_scalar_prefetch=0,
            grid=(N, n_row_blocks),
            in_specs=[
                # Whole padded image of batch n; block index independent of the
                # row axis, so it is DMA'd once per batch element.
                pl.BlockSpec((None, Hp, Wp, CIN), lambda n, r: (n, 0, 0, 0)),
                pl.BlockSpec((KKC, COUT), lambda n, r: (0, 0)),
                pl.BlockSpec((1, COUT), lambda n, r: (0, 0)),
            ],
            out_specs=pl.BlockSpec((None, TH * Wo, COUT), lambda n, r: (n, r, 0)),
        ),
        compiler_params=pltpu.CompilerParams(
            dimension_semantics=("parallel", "parallel"),
            vmem_limit_bytes=vmem_limit),
    )(xp, w_folded, shift)

    out_nhwc = out_flat.reshape(N, Ho, Wo, COUT)
    return jnp.transpose(out_nhwc, (0, 3, 1, 2))                       # back to NCHW


def _reference(x_nchw, weight, gamma, beta, running_mean, running_var,
               *, pad, dilation, eps=1e-5):
    """Pure-JAX f32 reference (lax dilated conv + eval-mode BN + ReLU)."""
    y = lax.conv_general_dilated(
        x_nchw, weight,
        window_strides=(1, 1),
        padding=[(pad, pad), (pad, pad)],
        rhs_dilation=(dilation, dilation),
        dimension_numbers=("NCHW", "OIHW", "NCHW"))
    inv_std = lax.rsqrt(running_var + eps)
    scale = (gamma * inv_std)[None, :, None, None]
    shift = (beta - running_mean * gamma * inv_std)[None, :, None, None]
    return jnp.maximum(y * scale + shift, 0.0)


if __name__ == "__main__":
    # Shapes consistent with:
    #   Atrous_Convolution(input_channels=4, kernel_size=3, pad=2,
    #                      dilation_rate=2, output_channels=256)
    N, CIN, H, W = 2, 4, 16, 16
    COUT, K, PAD, DIL = 256, 3, 2, 2

    key = jax.random.PRNGKey(0)
    k_x, k_w, k_g, k_b, k_m, k_v = jax.random.split(key, 6)

    x = jax.random.normal(k_x, (N, CIN, H, W), dtype=jnp.float32)
    weight = jax.random.normal(k_w, (COUT, CIN, K, K), dtype=jnp.float32) * 0.1
    gamma = jax.random.uniform(k_g, (COUT,), minval=0.5, maxval=1.5,
                               dtype=jnp.float32)
    beta = jax.random.normal(k_b, (COUT,), dtype=jnp.float32) * 0.1
    running_mean = jax.random.normal(k_m, (COUT,), dtype=jnp.float32) * 0.1
    running_var = jax.random.uniform(k_v, (COUT,), minval=0.5, maxval=1.5,
                                     dtype=jnp.float32)

    out = atrous_convolution(x, weight, gamma, beta, running_mean, running_var,
                             pad=PAD, dilation=DIL)
    out = jax.block_until_ready(out)

    ref = _reference(x, weight, gamma, beta, running_mean, running_var,
                     pad=PAD, dilation=DIL)
    ref = jax.block_until_ready(ref)

    assert out.shape == (N, COUT, H, W), out.shape
    # bf16 MXU operands (f32 accumulation) -> loosened tolerance vs the f32 reference.
    rel_err = jnp.max(jnp.abs(out - ref) / (1.0 + jnp.abs(ref)))
    assert rel_err < 5e-2, float(rel_err)

    print("KERNEL_OK")
</pallas_src>

<mosaic_0001>
module attributes {stable_mosaic.version = 11 : i64} {
  func.func @kernel(%arg0: i32, %arg1: i32, %arg2: memref<1x20x20x4xbf16, #tpu.memory_space<vmem>>, %arg3: memref<36x256xbf16, #tpu.memory_space<vmem>>, %arg4: memref<1x256xf32, #tpu.memory_space<vmem>>, %arg5: memref<1x256x256xf32, #tpu.memory_space<vmem>>) attributes {dimension_semantics = [#tpu.dimension_semantics<parallel>, #tpu.dimension_semantics<parallel>], iteration_bounds = array<i64: 2, 1>, scalar_prefetch = 0 : i64, scratch_operands = 0 : i64, tpu.core_type = #tpu.core_type<tc>, window_params = [{transform_indices = @transform_0, window_bounds = array<i64: 1, 20, 20, 4>}, {pipeline_mode = #tpu.pipeline_mode<synchronous>, transform_indices = @transform_1, window_bounds = array<i64: 36, 256>}, {pipeline_mode = #tpu.pipeline_mode<synchronous>, transform_indices = @transform_2, window_bounds = array<i64: 1, 256>}, {transform_indices = @transform_3, window_bounds = array<i64: 1, 256, 256>}]} {
    %c16_i32 = arith.constant 16 : i32
    %0 = arith.muli %arg1, %c16_i32 : i32
    %1 = tpu.assume_multiple %0, 16 : i32
    %c0_i32 = arith.constant 0 : i32
    %2 = arith.addi %1, %c0_i32 : i32
    %c0 = arith.constant 0 : index
    %3 = arith.index_cast %2 : i32 to index
    %c0_0 = arith.constant 0 : index
    %c0_1 = arith.constant 0 : index
    %4 = vector.load %arg2[%c0, %3, %c0_0, %c0_1] : memref<1x20x20x4xbf16, #tpu.memory_space<vmem>>, vector<1x16x20x4xbf16>
    %5 = vector.shape_cast %4 : vector<1x16x20x4xbf16> to vector<16x20x4xbf16>
    %6 = vector.extract_strided_slice %5 {offsets = [0, 0, 0], sizes = [16, 16, 4], strides = [1, 1, 1]} : vector<16x20x4xbf16> to vector<16x16x4xbf16>
    %7 = vector.extract_strided_slice %5 {offsets = [0, 2, 0], sizes = [16, 16, 4], strides = [1, 1, 1]} : vector<16x20x4xbf16> to vector<16x16x4xbf16>
    %8 = vector.extract_strided_slice %5 {offsets = [0, 4, 0], sizes = [16, 16, 4], strides = [1, 1, 1]} : vector<16x20x4xbf16> to vector<16x16x4xbf16>
    %c2_i32 = arith.constant 2 : i32
    %9 = arith.addi %1, %c2_i32 : i32
    %c0_2 = arith.constant 0 : index
    %10 = arith.index_cast %9 : i32 to index
    %c0_3 = arith.constant 0 : index
    %c0_4 = arith.constant 0 : index
    %11 = vector.load %arg2[%c0_2, %10, %c0_3, %c0_4] : memref<1x20x20x4xbf16, #tpu.memory_space<vmem>>, vector<1x16x20x4xbf16>
    %12 = vector.shape_cast %11 : vector<1x16x20x4xbf16> to vector<16x20x4xbf16>
    %13 = vector.extract_strided_slice %12 {offsets = [0, 0, 0], sizes = [16, 16, 4], strides = [1, 1, 1]} : vector<16x20x4xbf16> to vector<16x16x4xbf16>
    %14 = vector.extract_strided_slice %12 {offsets = [0, 2, 0], sizes = [16, 16, 4], strides = [1, 1, 1]} : vector<16x20x4xbf16> to vector<16x16x4xbf16>
    %15 = vector.extract_strided_slice %12 {offsets = [0, 4, 0], sizes = [16, 16, 4], strides = [1, 1, 1]} : vector<16x20x4xbf16> to vector<16x16x4xbf16>
    %c4_i32 = arith.constant 4 : i32
    %16 = arith.addi %1, %c4_i32 : i32
    %c0_5 = arith.constant 0 : index
    %17 = arith.index_cast %16 : i32 to index
    %c0_6 = arith.constant 0 : index
    %c0_7 = arith.constant 0 : index
    %18 = vector.load %arg2[%c0_5, %17, %c0_6, %c0_7] : memref<1x20x20x4xbf16, #tpu.memory_space<vmem>>, vector<1x16x20x4xbf16>
    %19 = vector.shape_cast %18 : vector<1x16x20x4xbf16> to vector<16x20x4xbf16>
    %20 = vector.extract_strided_slice %19 {offsets = [0, 0, 0], sizes = [16, 16, 4], strides = [1, 1, 1]} : vector<16x20x4xbf16> to vector<16x16x4xbf16>
    %21 = vector.extract_strided_slice %19 {offsets = [0, 2, 0], sizes = [16, 16, 4], strides = [1, 1, 1]} : vector<16x20x4xbf16> to vector<16x16x4xbf16>
    %22 = vector.extract_strided_slice %19 {offsets = [0, 4, 0], sizes = [16, 16, 4], strides = [1, 1, 1]} : vector<16x20x4xbf16> to vector<16x16x4xbf16>
    %23 = tpu.concatenate %6, %7, %8, %13, %14, %15, %20, %21, %22 in 2 : vector<16x16x4xbf16>, vector<16x16x4xbf16>, vector<16x16x4xbf16>, vector<16x16x4xbf16>, vector<16x16x4xbf16>, vector<16x16x4xbf16>, vector<16x16x4xbf16>, vector<16x16x4xbf16>, vector<16x16x4xbf16> -> vector<16x16x36xbf16>
    %24 = vector.shape_cast %23 : vector<16x16x36xbf16> to vector<256x36xbf16>
    %c0_8 = arith.constant 0 : index
    %c0_9 = arith.constant 0 : index
    %25 = vector.load %arg3[%c0_8, %c0_9] : memref<36x256xbf16, #tpu.memory_space<vmem>>, vector<36x256xbf16>
    %cst = arith.constant dense<0.000000e+00> : vector<256x256xf32>
    %26 = tpu.matmul %24, %25, %cst {dimension_numbers = #tpu.dot_dimension_numbers<[1], [0], [0], [1], [0, 0, 1, 1], [], []>} : vector<256x36xbf16>, vector<36x256xbf16>, vector<256x256xf32> -> vector<256x256xf32>
    %c0_10 = arith.constant 0 : index
    %c0_11 = arith.constant 0 : index
    %27 = vector.load %arg4[%c0_10, %c0_11] : memref<1x256xf32, #tpu.memory_space<vmem>>, vector<1x256xf32>
    %28 = vector.broadcast %27 : vector<1x256xf32> to vector<256x256xf32>
    %29 = arith.addf %26, %28 : vector<256x256xf32>
    %cst_12 = arith.constant 0.000000e+00 : f32
    %30 = vector.broadcast %cst_12 : f32 to vector<256x256xf32>
    %31 = arith.maximumf %29, %30 : vector<256x256xf32>
    %c0_13 = arith.constant 0 : index
    %c0_14 = arith.constant 0 : index
    %c0_15 = arith.constant 0 : index
    %32 = vector.load %arg5[%c0_13, %c0_14, %c0_15] : memref<1x256x256xf32, #tpu.memory_space<vmem>>, vector<1x256x256xf32>
    %33 = vector.shape_cast %32 : vector<1x256x256xf32> to vector<256x256xf32>
    %34 = vector.shape_cast %31 : vector<256x256xf32> to vector<1x256x256xf32>
    tpu.vector_store %arg5[%c0_13, %c0_14, %c0_15], %34 {strides = array<i32>} : memref<1x256x256xf32, #tpu.memory_space<vmem>>, vector<1x256x256xf32>,
    return
  }
  func.func @transform_0(%arg0: i32, %arg1: i32) -> (i32, i32, i32, i32) {
    %c0_i32 = arith.constant 0 : i32
    %c0_i32_0 = arith.constant 0 : i32
    %c0_i32_1 = arith.constant 0 : i32
    %c0_i32_2 = arith.constant 0 : i32
    return %arg0, %c0_i32, %c0_i32_0, %c0_i32_1 : i32, i32, i32, i32
  }
  func.func @transform_1(%arg0: i32, %arg1: i32) -> (i32, i32) {
    %c0_i32 = arith.constant 0 : i32
    %c0_i32_0 = arith.constant 0 : i32
    %c0_i32_1 = arith.constant 0 : i32
    return %c0_i32, %c0_i32_0 : i32, i32
  }
  func.func @transform_2(%arg0: i32, %arg1: i32) -> (i32, i32) {
    %c0_i32 = arith.constant 0 : i32
    %c0_i32_0 = arith.constant 0 : i32
    %c0_i32_1 = arith.constant 0 : i32
    return %c0_i32, %c0_i32_0 : i32, i32
  }
  func.func @transform_3(%arg0: i32, %arg1: i32) -> (i32, i32, i32) {
    %c0_i32 = arith.constant 0 : i32
    %c0_i32_0 = arith.constant 0 : i32
    return %arg0, %arg1, %c0_i32 : i32, i32, i32
  }
}

</mosaic_0001>

<llo_original>
// kernel: tpu_custom_call.1
$region0: #{tpu_custom_call.1}
  #allocation0 [shape = 'u32[]', space=smem, size = 0x4, offset = 0x4, fixed_abs, tag = 'smem constant byte address 0x4 - core index']
  #allocation1 [shape = 'u32[144,128]{1,0:T(1,128)}', space=vmem, size = 0x12000, scoped, tag = 'internal scratch']
  %s0 = inlined_call_operand.vmem [shape: bf16[2,20,20,4], index: 0, kind: input, shape index: {}]
  %s1 = inlined_call_operand.vmem [shape: bf16[36,256], index: 1, kind: input, shape index: {}]
  %s2 = inlined_call_operand.vmem [shape: f32[1,256], index: 2, kind: input, shape index: {}]
  %s3 = inlined_call_operand.hbm [shape: f32[2,256,256], index: 3, kind: output, shape index: {}]
  %s4 = sld [smem:[#allocation0]]
  $region45: #{tpu_custom_call.1} parent=0
    _
  %s6 = ssub.s32 1, %s4
  %s7 = scalar_select 0, %s6, %s4
  $region1: #{tpu_custom_call.1} parent=0
    #allocation2 [shape = 'u8[524288]{0}', space=vmem, size = 0x80000, scoped, tag = 'output window, operand 0']
    #allocation3 [shape = 's32[2]{0}', space=sflag, size = 0x8, scoped, tag = 'scoped memory for tpu_custom_call.1']
    %8 = vsyncpa [#allocation3], 0
    %s9 = scalar_lea.sflag [#allocation3], 1
    %10 = vsyncpa %s9, 0
    loop: start=0, step=1, limit=4
    $region2: #{tpu_custom_call.1} parent=1 // loop_pre_header
      _
    $region3: #{tpu_custom_call.1} parent=1 // loop_header
      %s12 = sphi 0, %s16
      %p13 = scmp.ge.s32.totalorder %s12, 4
      %s19 = sphi 0, %s31
      %s20 = sphi 0, %s27
      %s21 = sphi 0, %s19
      %s22 = sphi 0, %s20
      %s23 = sphi 0, %s21
      %s24 = sphi 0, %s22
      %s34 = sphi 0, %s36
      %s37 = sphi 0, %s34
      %s38 = sphi 0, %s37
      %s54 = sphi 0, %s38
      %s58 = sphi 0, %s58
      %s60 = sphi 0, %s58
      %s61 = sphi 0, %s60
      %s75 = sphi 0, %s61
      %s79 = sphi 0, %s79
      %s81 = sphi 0, %s79
      %s82 = sphi 0, %s81
      %s96 = sphi 0, %s82
      %s104 = sphi 0, %s106
      %s107 = sphi 0, %s104
      %s108 = sphi 0, %s107
      %s124 = sphi 0, %s108
    $region4: #{tpu_custom_call.1} parent=1 // loop_header_branch
      %15 = sbr.rel (%p13) target = $region8
    $region5: #{tpu_custom_call.1} parent=1 // loop_body
      %s17 = ssub.s32 %s12, 1
      %s18 = ssub.s32 %s12, 2
      %s25 = sadd.s32 1, %s20
      %p26 = scmp.ge.s32.totalorder %s25, 1
      %s27 = scalar_select %p26, 0, %s25
      %s28 = sadd.s32 1, %s19
      %s29 = scalar_select %p26, %s28, %s19
      %p30 = scmp.ge.s32.totalorder %s29, 2
      %s31 = scalar_select %p30, 0, %s29
      %s32 = ssub.s32 %s19, %s31
      %p33 = scmp.eq.s32.totalorder %s32, 0
      %s35 = sadd.s32 %s34, 1
      %s36 = scalar_select %p33, %s34, %s35
      %p39 = pneg %p33
      %p40 = scmp.eq.s32.totalorder %s12, 1
      %p41 = por %p39, %p40
      %p42 = scmp.ne.s32.totalorder %s34, %s37
      %p43 = scmp.eq.s32.totalorder %s12, 0
      %p44 = por %p42, %p43
      %p45 = scmp.ne.s32.totalorder %s34, %s37
      %p46 = scmp.eq.s32.totalorder %s17, 1
      %p47 = por %p45, %p46
      %p48 = scmp.ne.s32.totalorder %s37, %s38
      %p49 = scmp.eq.s32.totalorder %s17, 0
      %p50 = por %p48, %p49
      %p51 = scmp.ne.s32.totalorder %s37, %s38
      %p52 = scmp.eq.s32.totalorder %s18, 1
      %p53 = por %p51, %p52
      %p55 = scmp.ne.s32.totalorder %s38, %s54
      %p56 = scmp.eq.s32.totalorder %s18, 0
      %p57 = por %p55, %p56
      %s59 = sadd.s32 %s58, 1
      %p62 = scmp.eq.s32.totalorder %s12, 1
      %p63 = scmp.ne.s32.totalorder %s58, %s60
      %p64 = scmp.eq.s32.totalorder %s12, 0
      %p65 = por %p63, %p64
      %p66 = scmp.ne.s32.totalorder %s58, %s60
      %p67 = scmp.eq.s32.totalorder %s17, 1
      %p68 = por %p66, %p67
      %p69 = scmp.ne.s32.totalorder %s60, %s61
      %p70 = scmp.eq.s32.totalorder %s17, 0
      %p71 = por %p69, %p70
      %p72 = scmp.ne.s32.totalorder %s60, %s61
      %p73 = scmp.eq.s32.totalorder %s18, 1
      %p74 = por %p72, %p73
      %p76 = scmp.ne.s32.totalorder %s61, %s75
      %p77 = scmp.eq.s32.totalorder %s18, 0
      %p78 = por %p76, %p77
      %s80 = sadd.s32 %s79, 1
      %p83 = scmp.eq.s32.totalorder %s12, 1
      %p84 = scmp.ne.s32.totalorder %s79, %s81
      %p85 = scmp.eq.s32.totalorder %s12, 0
      %p86 = por %p84, %p85
      %p87 = scmp.ne.s32.totalorder %s79, %s81
      %p88 = scmp.eq.s32.totalorder %s17, 1
      %p89 = por %p87, %p88
      %p90 = scmp.ne.s32.totalorder %s81, %s82
      %p91 = scmp.eq.s32.totalorder %s17, 0
      %p92 = por %p90, %p91
      %p93 = scmp.ne.s32.totalorder %s81, %s82
      %p94 = scmp.eq.s32.totalorder %s18, 1
      %p95 = por %p93, %p94
      %p97 = scmp.ne.s32.totalorder %s82, %s96
      %p98 = scmp.eq.s32.totalorder %s18, 0
      %p99 = por %p97, %p98
      %s100 = ssub.s32 %s19, %s31
      %s101 = ssub.s32 %s20, %s27
      %s102 = sor.u32 %s100, %s101
      %p103 = scmp.eq.s32.totalorder %s102, 0
      %s105 = sadd.s32 %s104, 1
      %s106 = scalar_select %p103, %s104, %s105
      %p109 = pneg %p103
      %p110 = scmp.eq.s32.totalorder %s12, 1
      %p111 = por %p109, %p110
      %p112 = scmp.ne.s32.totalorder %s104, %s107
      %p113 = scmp.eq.s32.totalorder %s12, 0
      %p114 = por %p112, %p113
      %p115 = scmp.ne.s32.totalorder %s104, %s107
      %p116 = scmp.eq.s32.totalorder %s17, 1
      %p117 = por %p115, %p116
      %p118 = scmp.ne.s32.totalorder %s107, %s108
      %p119 = scmp.eq.s32.totalorder %s17, 0
      %p120 = por %p118, %p119
      %p121 = scmp.ne.s32.totalorder %s107, %s108
      %p122 = scmp.eq.s32.totalorder %s18, 1
      %p123 = por %p121, %p122
      %p125 = scmp.ne.s32.totalorder %s108, %s124
      %p126 = scmp.eq.s32.totalorder %s18, 0
      %p127 = por %p125, %p126
      %p128 = scmp.le.s32.totalorder 1, %s12
      %p129 = scmp.lt.s32.totalorder %s12, 3
      %p130 = pnand %p128, %p129
      %p131 = pneg %p130
      // Predicated region
      $region9: #{tpu_custom_call.1} parent=5 // pred_check
        _
      $region10: #{tpu_custom_call.1} parent=5 // pred_check_branch
        %133 = sbr.rel (%p130) target = $region12
      $region11: #{tpu_custom_call.1} parent=5 // pred_region
        %s134 = ssub.s32 %s12, 1
        // Predicated region
        $region13: #{tpu_custom_call.1} parent=11 // pred_check
          %p135 = pneg %p71
        $region14: #{tpu_custom_call.1} parent=11 // pred_check_branch
          %137 = sbr.rel (%p135) target = $region16
        $region15: #{tpu_custom_call.1} parent=11 // pred_region
          _
        $region16: #{tpu_custom_call.1} parent=11 // pred_fallthru
          _
        // Predicated region
        $region17: #{tpu_custom_call.1} parent=11 // pred_check
          %p138 = pneg %p92
        $region18: #{tpu_custom_call.1} parent=11 // pred_check_branch
          %140 = sbr.rel (%p138) target = $region20
        $region19: #{tpu_custom_call.1} parent=11 // pred_region
          _
        $region20: #{tpu_custom_call.1} parent=11 // pred_fallthru
          _
      $region12: #{tpu_custom_call.1} parent=5 // pred_fallthru
        _
      %p141 = scmp.lt.s32.totalorder %s12, 2
      // Predicated region
      $region21: #{tpu_custom_call.1} parent=5 // pred_check
        %p142 = pneg %p141
      $region22: #{tpu_custom_call.1} parent=5 // pred_check_branch
        %144 = sbr.rel (%p142) target = $region24
      $region23: #{tpu_custom_call.1} parent=5 // pred_region
        // Predicated region
        $region25: #{tpu_custom_call.1} parent=23 // pred_check
          %p145 = pneg %p44
        $region26: #{tpu_custom_call.1} parent=23 // pred_check_branch
          %147 = sbr.rel (%p145) target = $region28
        $region27: #{tpu_custom_call.1} parent=23 // pred_region
          %p148 = scmp.lt.s32.totalorder %s19, 1
          %s149 = scalar_select %p148, %s19, 1
          %s150 = smul.addr %s149, 60
          %s151 = smul.addr %s150, 4
          %s152 = scalar_lea.vmem %s0, %s151
        $region28: #{tpu_custom_call.1} parent=23 // pred_fallthru
          _
      $region24: #{tpu_custom_call.1} parent=5 // pred_fallthru
        _
      %p153 = scmp.le.s32.totalorder 1, %s12
      %p154 = scmp.lt.s32.totalorder %s12, 3
      %p155 = pnand %p153, %p154
      %p156 = pneg %p155
      // Predicated region
      $region29: #{tpu_custom_call.1} parent=5 // pred_check
        _
      $region30: #{tpu_custom_call.1} parent=5 // pred_check_branch
        %158 = sbr.rel (%p155) target = $region32
      $region31: #{tpu_custom_call.1} parent=5 // pred_region
        %s159 = ssub.s32 %s12, 1
        %p160 = scmp.lt.s32.totalorder %s21, 1
        %s161 = scalar_select %p160, %s21, 1
        %s162 = smul.addr %s161, 60
        %s163 = smul.addr %s162, 4
        %s164 = scalar_lea.vmem %s0, %s163
        %p165 = pneg %p50
        %p166 = pneg %p47
        %p167 = pneg %p71
        %p168 = pneg %p68
        %p169 = pneg %p92
        %p170 = pneg %p89
        %p171 = pneg %p120
        %p172 = pneg %p117
        %s173 = sand.u32 %s107, 1
        %s174 = scalar_lea.sflag [#allocation3], %s173
        %s175 = sand.u32 %s107, 1
        %s176 = smul.addr %s175, 512
        %s177 = scalar_lea.vmem [#allocation2], %s176
        %p178 = scmp.lt.s32.totalorder %s21, 1
        %s179 = scalar_select %p178, %s21, 1
        %s180 = smul.addr %s179, 60
        %s181 = smul.addr %s180, 4
        %s182 = scalar_lea.vmem %s0, %s181
        %s183 = smul.u32 32, %s22
        %s185 = smul.u32 %s22, 16
        %s186 = smul.u32 %s185, 3
        %s187 = smul.addr %s186, 4
        %s188 = scalar_lea.vmem %s182, %s187
        %v189 = vld [vmem:[%s188] sm:$0xf]
        %v190 = vld [vmem:[%s188 + $0x4] sm:$0xf]
        %v191 = vld [vmem:[%s188 + $0x8] sm:$0x3]
        %v192 = vld [vmem:[%s188 + $0xc] sm:$0xf]
        %v193 = vld [vmem:[%s188 + $0x10] sm:$0xf]
        %v194 = vld [vmem:[%s188 + $0x14] sm:$0x3]
        %v195 = vld [vmem:[%s188 + $0x18] sm:$0xf]
        %v196 = vld [vmem:[%s188 + $0x1c] sm:$0xf]
        %v197 = vld [vmem:[%s188 + $0x20] sm:$0x3]
        %v198 = vld [vmem:[%s188 + $0x24] sm:$0xf]
        %v199 = vld [vmem:[%s188 + $0x28] sm:$0xf]
        %v200 = vld [vmem:[%s188 + $0x2c] sm:$0x3]
        %v201 = vld [vmem:[%s188 + $0x30] sm:$0xf]
        %v202 = vld [vmem:[%s188 + $0x34] sm:$0xf]
        %v203 = vld [vmem:[%s188 + $0x38] sm:$0x3]
        %v204 = vld [vmem:[%s188 + $0x3c] sm:$0xf]
        %v205 = vld [vmem:[%s188 + $0x40] sm:$0xf]
        %v206 = vld [vmem:[%s188 + $0x44] sm:$0x3]
        %v207 = vld [vmem:[%s188 + $0x48] sm:$0xf]
        %v208 = vld [vmem:[%s188 + $0x4c] sm:$0xf]
        %v209 = vld [vmem:[%s188 + $0x50] sm:$0x3]
        %v210 = vld [vmem:[%s188 + $0x54] sm:$0xf]
        %v211 = vld [vmem:[%s188 + $0x58] sm:$0xf]
        %v212 = vld [vmem:[%s188 + $0x5c] sm:$0x3]
        %v213 = vld [vmem:[%s188 + $0x60] sm:$0xf]
        %v214 = vld [vmem:[%s188 + $0x64] sm:$0xf]
        %v215 = vld [vmem:[%s188 + $0x68] sm:$0x3]
        %v216 = vld [vmem:[%s188 + $0x6c] sm:$0xf]
        %v217 = vld [vmem:[%s188 + $0x70] sm:$0xf]
        %v218 = vld [vmem:[%s188 + $0x74] sm:$0x3]
        %v219 = vld [vmem:[%s188 + $0x78] sm:$0xf]
        %v220 = vld [vmem:[%s188 + $0x7c] sm:$0xf]
        %v221 = vld [vmem:[%s188 + $0x80] sm:$0x3]
        %v222 = vld [vmem:[%s188 + $0x84] sm:$0xf]
        %v223 = vld [vmem:[%s188 + $0x88] sm:$0xf]
        %v224 = vld [vmem:[%s188 + $0x8c] sm:$0x3]
        %v225 = vld [vmem:[%s188 + $0x90] sm:$0xf]
        %v226 = vld [vmem:[%s188 + $0x94] sm:$0xf]
        %v227 = vld [vmem:[%s188 + $0x98] sm:$0x3]
        %v228 = vld [vmem:[%s188 + $0x9c] sm:$0xf]
        %v229 = vld [vmem:[%s188 + $0xa0] sm:$0xf]
        %v230 = vld [vmem:[%s188 + $0xa4] sm:$0x3]
        %v231 = vld [vmem:[%s188 + $0xa8] sm:$0xf]
        %v232 = vld [vmem:[%s188 + $0xac] sm:$0xf]
        %v233 = vld [vmem:[%s188 + $0xb0] sm:$0x3]
        %v234 = vld [vmem:[%s188 + $0xb4] sm:$0xf]
        %v235 = vld [vmem:[%s188 + $0xb8] sm:$0xf]
        %v236 = vld [vmem:[%s188 + $0xbc] sm:$0x3]
        %s237 = sadd.s32 %s185, 2
        %s238 = smul.u32 %s237, 3
        %s239 = smul.addr %s238, 4
        %s240 = scalar_lea.vmem %s182, %s239
        %v241 = vld [vmem:[%s240] sm:$0xf]
        %v242 = vld [vmem:[%s240 + $0x4] sm:$0xf]
        %v243 = vld [vmem:[%s240 + $0x8] sm:$0x3]
        %v244 = vld [vmem:[%s240 + $0xc] sm:$0xf]
        %v245 = vld [vmem:[%s240 + $0x10] sm:$0xf]
        %v246 = vld [vmem:[%s240 + $0x14] sm:$0x3]
        %v247 = vld [vmem:[%s240 + $0x18] sm:$0xf]
        %v248 = vld [vmem:[%s240 + $0x1c] sm:$0xf]
        %v249 = vld [vmem:[%s240 + $0x20] sm:$0x3]
        %v250 = vld [vmem:[%s240 + $0x24] sm:$0xf]
        %v251 = vld [vmem:[%s240 + $0x28] sm:$0xf]
        %v252 = vld [vmem:[%s240 + $0x2c] sm:$0x3]
        %v253 = vld [vmem:[%s240 + $0x30] sm:$0xf]
        %v254 = vld [vmem:[%s240 + $0x34] sm:$0xf]
        %v255 = vld [vmem:[%s240 + $0x38] sm:$0x3]
        %v256 = vld [vmem:[%s240 + $0x3c] sm:$0xf]
        %v257 = vld [vmem:[%s240 + $0x40] sm:$0xf]
        %v258 = vld [vmem:[%s240 + $0x44] sm:$0x3]
        %v259 = vld [vmem:[%s240 + $0x48] sm:$0xf]
        %v260 = vld [vmem:[%s240 + $0x4c] sm:$0xf]
        %v261 = vld [vmem:[%s240 + $0x50] sm:$0x3]
        %v262 = vld [vmem:[%s240 + $0x54] sm:$0xf]
        %v263 = vld [vmem:[%s240 + $0x58] sm:$0xf]
        %v264 = vld [vmem:[%s240 + $0x5c] sm:$0x3]
        %v265 = vld [vmem:[%s240 + $0x60] sm:$0xf]
        %v266 = vld [vmem:[%s240 + $0x64] sm:$0xf]
        %v267 = vld [vmem:[%s240 + $0x68] sm:$0x3]
        %v268 = vld [vmem:[%s240 + $0x6c] sm:$0xf]
        %v269 = vld [vmem:[%s240 + $0x70] sm:$0xf]
        %v270 = vld [vmem:[%s240 + $0x74] sm:$0x3]
        %v271 = vld [vmem:[%s240 + $0x78] sm:$0xf]
        %v272 = vld [vmem:[%s240 + $0x7c] sm:$0xf]
        %v273 = vld [vmem:[%s240 + $0x80] sm:$0x3]
        %v274 = vld [vmem:[%s240 + $0x84] sm:$0xf]
        %v275 = vld [vmem:[%s240 + $0x88] sm:$0xf]
        %v276 = vld [vmem:[%s240 + $0x8c] sm:$0x3]
        %v277 = vld [vmem:[%s240 + $0x90] sm:$0xf]
        %v278 = vld [vmem:[%s240 + $0x94] sm:$0xf]
        %v279 = vld [vmem:[%s240 + $0x98] sm:$0x3]
        %v280 = vld [vmem:[%s240 + $0x9c] sm:$0xf]
        %v281 = vld [vmem:[%s240 + $0xa0] sm:$0xf]
        %v282 = vld [vmem:[%s240 + $0xa4] sm:$0x3]
        %v283 = vld [vmem:[%s240 + $0xa8] sm:$0xf]
        %v284 = vld [vmem:[%s240 + $0xac] sm:$0xf]
        %v285 = vld [vmem:[%s240 + $0xb0] sm:$0x3]
        %v286 = vld [vmem:[%s240 + $0xb4] sm:$0xf]
        %v287 = vld [vmem:[%s240 + $0xb8] sm:$0xf]
        %v288 = vld [vmem:[%s240 + $0xbc] sm:$0x3]
        %s289 = sadd.s32 %s185, 4
        %s290 = smul.u32 %s289, 3
        %s291 = smul.addr %s290, 4
        %s292 = scalar_lea.vmem %s182, %s291
        %v293 = vld [vmem:[%s292] sm:$0xf]
        %v294 = vld [vmem:[%s292 + $0x4] sm:$0xf]
        %v295 = vld [vmem:[%s292 + $0x8] sm:$0x3]
        %v296 = vld [vmem:[%s292 + $0xc] sm:$0xf]
        %v297 = vld [vmem:[%s292 + $0x10] sm:$0xf]
        %v298 = vld [vmem:[%s292 + $0x14] sm:$0x3]
        %v299 = vld [vmem:[%s292 + $0x18] sm:$0xf]
        %v300 = vld [vmem:[%s292 + $0x1c] sm:$0xf]
        %v301 = vld [vmem:[%s292 + $0x20] sm:$0x3]
        %v302 = vld [vmem:[%s292 + $0x24] sm:$0xf]
        %v303 = vld [vmem:[%s292 + $0x28] sm:$0xf]
        %v304 = vld [vmem:[%s292 + $0x2c] sm:$0x3]
        %v305 = vld [vmem:[%s292 + $0x30] sm:$0xf]
        %v306 = vld [vmem:[%s292 + $0x34] sm:$0xf]
        %v307 = vld [vmem:[%s292 + $0x38] sm:$0x3]
        %v308 = vld [vmem:[%s292 + $0x3c] sm:$0xf]
        %v309 = vld [vmem:[%s292 + $0x40] sm:$0xf]
        %v310 = vld [vmem:[%s292 + $0x44] sm:$0x3]
        %v311 = vld [vmem:[%s292 + $0x48] sm:$0xf]
        %v312 = vld [vmem:[%s292 + $0x4c] sm:$0xf]
        %v313 = vld [vmem:[%s292 + $0x50] sm:$0x3]
        %v314 = vld [vmem:[%s292 + $0x54] sm:$0xf]
        %v315 = vld [vmem:[%s292 + $0x58] sm:$0xf]
        %v316 = vld [vmem:[%s292 + $0x5c] sm:$0x3]
        %v317 = vld [vmem:[%s292 + $0x60] sm:$0xf]
        %v318 = vld [vmem:[%s292 + $0x64] sm:$0xf]
        %v319 = vld [vmem:[%s292 + $0x68] sm:$0x3]
        %v320 = vld [vmem:[%s292 + $0x6c] sm:$0xf]
        %v321 = vld [vmem:[%s292 + $0x70] sm:$0xf]
        %v322 = vld [vmem:[%s292 + $0x74] sm:$0x3]
        %v323 = vld [vmem:[%s292 + $0x78] sm:$0xf]
        %v324 = vld [vmem:[%s292 + $0x7c] sm:$0xf]
        %v325 = vld [vmem:[%s292 + $0x80] sm:$0x3]
        %v326 = vld [vmem:[%s292 + $0x84] sm:$0xf]
        %v327 = vld [vmem:[%s292 + $0x88] sm:$0xf]
        %v328 = vld [vmem:[%s292 + $0x8c] sm:$0x3]
        %v329 = vld [vmem:[%s292 + $0x90] sm:$0xf]
        %v330 = vld [vmem:[%s292 + $0x94] sm:$0xf]
        %v331 = vld [vmem:[%s292 + $0x98] sm:$0x3]
        %v332 = vld [vmem:[%s292 + $0x9c] sm:$0xf]
        %v333 = vld [vmem:[%s292 + $0xa0] sm:$0xf]
        %v334 = vld [vmem:[%s292 + $0xa4] sm:$0x3]
        %v335 = vld [vmem:[%s292 + $0xa8] sm:$0xf]
        %v336 = vld [vmem:[%s292 + $0xac] sm:$0xf]
        %v337 = vld [vmem:[%s292 + $0xb0] sm:$0x3]
        %v338 = vld [vmem:[%s292 + $0xb4] sm:$0xf]
        %v339 = vld [vmem:[%s292 + $0xb8] sm:$0xf]
        %v340 = vld [vmem:[%s292 + $0xbc] sm:$0x3]
        %v373 = vunpack.c.l.b16 %v189
        %v374 = vunpack.c.l.b16 %v190
        %v375 = vunpack.c.l.b16 %v192
        %v376 = vunpack.c.l.b16 %v193
        %v377 = vunpack.c.l.b16 %v195
        %v378 = vunpack.c.l.b16 %v196
        %v379 = vunpack.c.l.b16 %v198
        %v380 = vunpack.c.l.b16 %v199
        %v381 = vunpack.c.l.b16 %v201
        %v382 = vunpack.c.l.b16 %v202
        %v383 = vunpack.c.l.b16 %v204
        %v384 = vunpack.c.l.b16 %v205
        %v385 = vunpack.c.l.b16 %v207
        %v386 = vunpack.c.l.b16 %v208
        %v387 = vunpack.c.l.b16 %v210
        %v388 = vunpack.c.l.b16 %v211
        %v389 = vunpack.c.l.b16 %v213
        %v390 = vunpack.c.l.b16 %v214
        %v391 = vunpack.c.l.b16 %v216
        %v392 = vunpack.c.l.b16 %v217
        %v393 = vunpack.c.l.b16 %v219
        %v394 = vunpack.c.l.b16 %v220
        %v395 = vunpack.c.l.b16 %v222
        %v396 = vunpack.c.l.b16 %v223
        %v397 = vunpack.c.l.b16 %v225
        %v398 = vunpack.c.l.b16 %v226
        %v399 = vunpack.c.l.b16 %v228
        %v400 = vunpack.c.l.b16 %v229
        %v401 = vunpack.c.l.b16 %v231
        %v402 = vunpack.c.l.b16 %v232
        %v403 = vunpack.c.l.b16 %v234
        %v404 = vunpack.c.l.b16 %v235
        %v405 = vpack.c.b16 %v374, %v373
        %v406 = vpack.c.b16 %v376, %v375
        %v407 = vpack.c.b16 %v378, %v377
        %v408 = vpack.c.b16 %v380, %v379
        %v409 = vpack.c.b16 %v382, %v381
        %v410 = vpack.c.b16 %v384, %v383
        %v411 = vpack.c.b16 %v386, %v385
        %v412 = vpack.c.b16 %v388, %v387
        %v413 = vpack.c.b16 %v390, %v389
        %v414 = vpack.c.b16 %v392, %v391
        %v415 = vpack.c.b16 %v394, %v393
        %v416 = vpack.c.b16 %v396, %v395
        %v417 = vpack.c.b16 %v398, %v397
        %v418 = vpack.c.b16 %v400, %v399
        %v419 = vpack.c.b16 %v402, %v401
        %v420 = vpack.c.b16 %v404, %v403
        %v437 = vunpack.c.l.b16 %v191
        %v438 = vunpack.c.l.b16 %v194
        %v439 = vunpack.c.l.b16 %v197
        %v440 = vunpack.c.l.b16 %v200
        %v441 = vunpack.c.l.b16 %v203
        %v442 = vunpack.c.l.b16 %v206
        %v443 = vunpack.c.l.b16 %v209
        %v444 = vunpack.c.l.b16 %v212
        %v445 = vunpack.c.l.b16 %v215
        %v446 = vunpack.c.l.b16 %v218
        %v447 = vunpack.c.l.b16 %v221
        %v448 = vunpack.c.l.b16 %v224
        %v449 = vunpack.c.l.b16 %v227
        %v450 = vunpack.c.l.b16 %v230
        %v451 = vunpack.c.l.b16 %v233
        %v452 = vunpack.c.l.b16 %v236
        %v453 = vpack.c.b16 %v437, %v437
        %v454 = vpack.c.b16 %v438, %v438
        %v455 = vpack.c.b16 %v439, %v439
        %v456 = vpack.c.b16 %v440, %v440
        %v457 = vpack.c.b16 %v441, %v441
        %v458 = vpack.c.b16 %v442, %v442
        %v459 = vpack.c.b16 %v443, %v443
        %v460 = vpack.c.b16 %v444, %v444
        %v461 = vpack.c.b16 %v445, %v445
        %v462 = vpack.c.b16 %v446, %v446
        %v463 = vpack.c.b16 %v447, %v447
        %v464 = vpack.c.b16 %v448, %v448
        %v465 = vpack.c.b16 %v449, %v449
        %v466 = vpack.c.b16 %v450, %v450
        %v467 = vpack.c.b16 %v451, %v451
        %v468 = vpack.c.b16 %v452, %v452
        %vm469 = vcmask 1046528
        %v470 = vrot.slane %v405, 1
        %v471 = vrot.slane %v453, 1
        %v472 = vsel %vm469, %v470, %v471
        %v473 = vrot.slane %v406, 1
        %v474 = vrot.slane %v454, 1
        %v475 = vsel %vm469, %v473, %v474
        %v476 = vrot.slane %v407, 1
        %v477 = vrot.slane %v455, 1
        %v478 = vsel %vm469, %v476, %v477
        %v479 = vrot.slane %v408, 1
        %v480 = vrot.slane %v456, 1
        %v481 = vsel %vm469, %v479, %v480
        %v482 = vrot.slane %v409, 1
        %v483 = vrot.slane %v457, 1
        %v484 = vsel %vm469, %v482, %v483
        %v485 = vrot.slane %v410, 1
        %v486 = vrot.slane %v458, 1
        %v487 = vsel %vm469, %v485, %v486
        %v488 = vrot.slane %v411, 1
        %v489 = vrot.slane %v459, 1
        %v490 = vsel %vm469, %v488, %v489
        %v491 = vrot.slane %v412, 1
        %v492 = vrot.slane %v460, 1
        %v493 = vsel %vm469, %v491, %v492
        %v494 = vrot.slane %v413, 1
        %v495 = vrot.slane %v461, 1
        %v496 = vsel %vm469, %v494, %v495
        %v497 = vrot.slane %v414, 1
        %v498 = vrot.slane %v462, 1
        %v499 = vsel %vm469, %v497, %v498
        %v500 = vrot.slane %v415, 1
        %v501 = vrot.slane %v463, 1
        %v502 = vsel %vm469, %v500, %v501
        %v503 = vrot.slane %v416, 1
        %v504 = vrot.slane %v464, 1
        %v505 = vsel %vm469, %v503, %v504
        %v506 = vrot.slane %v417, 1
        %v507 = vrot.slane %v465, 1
        %v508 = vsel %vm469, %v506, %v507
        %v509 = vrot.slane %v418, 1
        %v510 = vrot.slane %v466, 1
        %v511 = vsel %vm469, %v509, %v510
        %v512 = vrot.slane %v419, 1
        %v513 = vrot.slane %v467, 1
        %v514 = vsel %vm469, %v512, %v513
        %v515 = vrot.slane %v420, 1
        %v516 = vrot.slane %v468, 1
        %v517 = vsel %vm469, %v515, %v516
        %518 = vrot.lane.b32.xlu0 %v472, 4
        %v519 = vpop.permute.xlu0 %518
        %520 = vrot.lane.b32.xlu0 %v475, 4
        %v521 = vpop.permute.xlu0 %520
        %522 = vrot.lane.b32.xlu0 %v478, 4
        %v523 = vpop.permute.xlu0 %522
        %524 = vrot.lane.b32.xlu0 %v481, 4
        %v525 = vpop.permute.xlu0 %524
        %526 = vrot.lane.b32.xlu0 %v484, 4
        %v527 = vpop.permute.xlu0 %526
        %528 = vrot.lane.b32.xlu0 %v487, 4
        %v529 = vpop.permute.xlu0 %528
        %530 = vrot.lane.b32.xlu0 %v490, 4
        %v531 = vpop.permute.xlu0 %530
        %532 = vrot.lane.b32.xlu0 %v493, 4
        %v533 = vpop.permute.xlu0 %532
        %534 = vrot.lane.b32.xlu0 %v496, 4
        %v535 = vpop.permute.xlu0 %534
        %536 = vrot.lane.b32.xlu0 %v499, 4
        %v537 = vpop.permute.xlu0 %536
        %538 = vrot.lane.b32.xlu0 %v502, 4
        %v539 = vpop.permute.xlu0 %538
        %540 = vrot.lane.b32.xlu0 %v505, 4
        %v541 = vpop.permute.xlu0 %540
        %542 = vrot.lane.b32.xlu0 %v508, 4
        %v543 = vpop.permute.xlu0 %542
        %544 = vrot.lane.b32.xlu0 %v511, 4
        %v545 = vpop.permute.xlu0 %544
        %546 = vrot.lane.b32.xlu0 %v514, 4
        %v547 = vpop.permute.xlu0 %546
        %548 = vrot.lane.b32.xlu0 %v517, 4
        %v549 = vpop.permute.xlu0 %548
        %vm550 = vcmask 1045504
        %v551 = vrot.slane %v405, 2
        %v552 = vrot.slane %v453, 2
        %v553 = vsel %vm550, %v551, %v552
        %v554 = vrot.slane %v406, 2
        %v555 = vrot.slane %v454, 2
        %v556 = vsel %vm550, %v554, %v555
        %v557 = vrot.slane %v407, 2
        %v558 = vrot.slane %v455, 2
        %v559 = vsel %vm550, %v557, %v558
        %v560 = vrot.slane %v408, 2
        %v561 = vrot.slane %v456, 2
        %v562 = vsel %vm550, %v560, %v561
        %v563 = vrot.slane %v409, 2
        %v564 = vrot.slane %v457, 2
        %v565 = vsel %vm550, %v563, %v564
        %v566 = vrot.slane %v410, 2
        %v567 = vrot.slane %v458, 2
        %v568 = vsel %vm550, %v566, %v567
        %v569 = vrot.slane %v411, 2
        %v570 = vrot.slane %v459, 2
        %v571 = vsel %vm550, %v569, %v570
        %v572 = vrot.slane %v412, 2
        %v573 = vrot.slane %v460, 2
        %v574 = vsel %vm550, %v572, %v573
        %v575 = vrot.slane %v413, 2
        %v576 = vrot.slane %v461, 2
        %v577 = vsel %vm550, %v575, %v576
        %v578 = vrot.slane %v414, 2
        %v579 = vrot.slane %v462, 2
        %v580 = vsel %vm550, %v578, %v579
        %v581 = vrot.slane %v415, 2
        %v582 = vrot.slane %v463, 2
        %v583 = vsel %vm550, %v581, %v582
        %v584 = vrot.slane %v416, 2
        %v585 = vrot.slane %v464, 2
        %v586 = vsel %vm550, %v584, %v585
        %v587 = vrot.slane %v417, 2
        %v588 = vrot.slane %v465, 2
        %v589 = vsel %vm550, %v587, %v588
        %v590 = vrot.slane %v418, 2
        %v591 = vrot.slane %v466, 2
        %v592 = vsel %vm550, %v590, %v591
        %v593 = vrot.slane %v419, 2
        %v594 = vrot.slane %v467, 2
        %v595 = vsel %vm550, %v593, %v594
        %v596 = vrot.slane %v420, 2
        %v597 = vrot.slane %v468, 2
        %v598 = vsel %vm550, %v596, %v597
        %599 = vrot.lane.b32.xlu0 %v553, 8
        %v600 = vpop.permute.xlu0 %599
        %601 = vrot.lane.b32.xlu0 %v556, 8
        %v602 = vpop.permute.xlu0 %601
        %603 = vrot.lane.b32.xlu0 %v559, 8
        %v604 = vpop.permute.xlu0 %603
        %605 = vrot.lane.b32.xlu0 %v562, 8
        %v606 = vpop.permute.xlu0 %605
        %607 = vrot.lane.b32.xlu0 %v565, 8
        %v608 = vpop.permute.xlu0 %607
        %609 = vrot.lane.b32.xlu0 %v568, 8
        %v610 = vpop.permute.xlu0 %609
        %611 = vrot.lane.b32.xlu0 %v571, 8
        %v612 = vpop.permute.xlu0 %611
        %613 = vrot.lane.b32.xlu0 %v574, 8
        %v614 = vpop.permute.xlu0 %613
        %615 = vrot.lane.b32.xlu0 %v577, 8
        %v616 = vpop.permute.xlu0 %615
        %617 = vrot.lane.b32.xlu0 %v580, 8
        %v618 = vpop.permute.xlu0 %617
        %619 = vrot.lane.b32.xlu0 %v583, 8
        %v620 = vpop.permute.xlu0 %619
        %621 = vrot.lane.b32.xlu0 %v586, 8
        %v622 = vpop.permute.xlu0 %621
        %623 = vrot.lane.b32.xlu0 %v589, 8
        %v624 = vpop.permute.xlu0 %623
        %625 = vrot.lane.b32.xlu0 %v592, 8
        %v626 = vpop.permute.xlu0 %625
        %627 = vrot.lane.b32.xlu0 %v595, 8
        %v628 = vpop.permute.xlu0 %627
        %629 = vrot.lane.b32.xlu0 %v598, 8
        %v630 = vpop.permute.xlu0 %629
        %v663 = vunpack.c.l.b16 %v241
        %v664 = vunpack.c.l.b16 %v242
        %v665 = vunpack.c.l.b16 %v244
        %v666 = vunpack.c.l.b16 %v245
        %v667 = vunpack.c.l.b16 %v247
        %v668 = vunpack.c.l.b16 %v248
        %v669 = vunpack.c.l.b16 %v250
        %v670 = vunpack.c.l.b16 %v251
        %v671 = vunpack.c.l.b16 %v253
        %v672 = vunpack.c.l.b16 %v254
        %v673 = vunpack.c.l.b16 %v256
        %v674 = vunpack.c.l.b16 %v257
        %v675 = vunpack.c.l.b16 %v259
        %v676 = vunpack.c.l.b16 %v260
        %v677 = vunpack.c.l.b16 %v262
        %v678 = vunpack.c.l.b16 %v263
        %v679 = vunpack.c.l.b16 %v265
        %v680 = vunpack.c.l.b16 %v266
        %v681 = vunpack.c.l.b16 %v268
        %v682 = vunpack.c.l.b16 %v269
        %v683 = vunpack.c.l.b16 %v271
        %v684 = vunpack.c.l.b16 %v272
        %v685 = vunpack.c.l.b16 %v274
        %v686 = vunpack.c.l.b16 %v275
        %v687 = vunpack.c.l.b16 %v277
        %v688 = vunpack.c.l.b16 %v278
        %v689 = vunpack.c.l.b16 %v280
        %v690 = vunpack.c.l.b16 %v281
        %v691 = vunpack.c.l.b16 %v283
        %v692 = vunpack.c.l.b16 %v284
        %v693 = vunpack.c.l.b16 %v286
        %v694 = vunpack.c.l.b16 %v287
        %v695 = vpack.c.b16 %v664, %v663
        %v696 = vpack.c.b16 %v666, %v665
        %v697 = vpack.c.b16 %v668, %v667
        %v698 = vpack.c.b16 %v670, %v669
        %v699 = vpack.c.b16 %v672, %v671
        %v700 = vpack.c.b16 %v674, %v673
        %v701 = vpack.c.b16 %v676, %v675
        %v702 = vpack.c.b16 %v678, %v677
        %v703 = vpack.c.b16 %v680, %v679
        %v704 = vpack.c.b16 %v682, %v681
        %v705 = vpack.c.b16 %v684, %v683
        %v706 = vpack.c.b16 %v686, %v685
        %v707 = vpack.c.b16 %v688, %v687
        %v708 = vpack.c.b16 %v690, %v689
        %v709 = vpack.c.b16 %v692, %v691
        %v710 = vpack.c.b16 %v694, %v693
        %711 = vrot.lane.b32.xlu0 %v695, 12
        %v712 = vpop.permute.xlu0 %711
        %713 = vrot.lane.b32.xlu0 %v696, 12
        %v714 = vpop.permute.xlu0 %713
        %715 = vrot.lane.b32.xlu0 %v697, 12
        %v716 = vpop.permute.xlu0 %715
        %717 = vrot.lane.b32.xlu0 %v698, 12
        %v718 = vpop.permute.xlu0 %717
        %719 = vrot.lane.b32.xlu0 %v699, 12
        %v720 = vpop.permute.xlu0 %719
        %721 = vrot.lane.b32.xlu0 %v700, 12
        %v722 = vpop.permute.xlu0 %721
        %723 = vrot.lane.b32.xlu0 %v701, 12
        %v724 = vpop.permute.xlu0 %723
        %725 = vrot.lane.b32.xlu0 %v702, 12
        %v726 = vpop.permute.xlu0 %725
        %727 = vrot.lane.b32.xlu0 %v703, 12
        %v728 = vpop.permute.xlu0 %727
        %729 = vrot.lane.b32.xlu0 %v704, 12
        %v730 = vpop.permute.xlu0 %729
        %731 = vrot.lane.b32.xlu0 %v705, 12
        %v732 = vpop.permute.xlu0 %731
        %733 = vrot.lane.b32.xlu0 %v706, 12
        %v734 = vpop.permute.xlu0 %733
        %735 = vrot.lane.b32.xlu0 %v707, 12
        %v736 = vpop.permute.xlu0 %735
        %737 = vrot.lane.b32.xlu0 %v708, 12
        %v738 = vpop.permute.xlu0 %737
        %739 = vrot.lane.b32.xlu0 %v709, 12
        %v740 = vpop.permute.xlu0 %739
        %741 = vrot.lane.b32.xlu0 %v710, 12
        %v742 = vpop.permute.xlu0 %741
        %v759 = vunpack.c.l.b16 %v243
        %v760 = vunpack.c.l.b16 %v246
        %v761 = vunpack.c.l.b16 %v249
        %v762 = vunpack.c.l.b16 %v252
        %v763 = vunpack.c.l.b16 %v255
        %v764 = vunpack.c.l.b16 %v258
        %v765 = vunpack.c.l.b16 %v261
        %v766 = vunpack.c.l.b16 %v264
        %v767 = vunpack.c.l.b16 %v267
        %v768 = vunpack.c.l.b16 %v270
        %v769 = vunpack.c.l.b16 %v273
        %v770 = vunpack.c.l.b16 %v276
        %v771 = vunpack.c.l.b16 %v279
        %v772 = vunpack.c.l.b16 %v282
        %v773 = vunpack.c.l.b16 %v285
        %v774 = vunpack.c.l.b16 %v288
        %v775 = vpack.c.b16 %v759, %v759
        %v776 = vpack.c.b16 %v760, %v760
        %v777 = vpack.c.b16 %v761, %v761
        %v778 = vpack.c.b16 %v762, %v762
        %v779 = vpack.c.b16 %v763, %v763
        %v780 = vpack.c.b16 %v764, %v764
        %v781 = vpack.c.b16 %v765, %v765
        %v782 = vpack.c.b16 %v766, %v766
        %v783 = vpack.c.b16 %v767, %v767
        %v784 = vpack.c.b16 %v768, %v768
        %v785 = vpack.c.b16 %v769, %v769
        %v786 = vpack.c.b16 %v770, %v770
        %v787 = vpack.c.b16 %v771, %v771
        %v788 = vpack.c.b16 %v772, %v772
        %v789 = vpack.c.b16 %v773, %v773
        %v790 = vpack.c.b16 %v774, %v774
        %v791 = vrot.slane %v695, 1
        %v792 = vrot.slane %v775, 1
        %v793 = vsel %vm469, %v791, %v792
        %v794 = vrot.slane %v696, 1
        %v795 = vrot.slane %v776, 1
        %v796 = vsel %vm469, %v794, %v795
        %v797 = vrot.slane %v697, 1
        %v798 = vrot.slane %v777, 1
        %v799 = vsel %vm469, %v797, %v798
        %v800 = vrot.slane %v698, 1
        %v801 = vrot.slane %v778, 1
        %v802 = vsel %vm469, %v800, %v801
        %v803 = vrot.slane %v699, 1
        %v804 = vrot.slane %v779, 1
        %v805 = vsel %vm469, %v803, %v804
        %v806 = vrot.slane %v700, 1
        %v807 = vrot.slane %v780, 1
        %v808 = vsel %vm469, %v806, %v807
        %v809 = vrot.slane %v701, 1
        %v810 = vrot.slane %v781, 1
        %v811 = vsel %vm469, %v809, %v810
        %v812 = vrot.slane %v702, 1
        %v813 = vrot.slane %v782, 1
        %v814 = vsel %vm469, %v812, %v813
        %v815 = vrot.slane %v703, 1
        %v816 = vrot.slane %v783, 1
        %v817 = vsel %vm469, %v815, %v816
        %v818 = vrot.slane %v704, 1
        %v819 = vrot.slane %v784, 1
        %v820 = vsel %vm469, %v818, %v819
        %v821 = vrot.slane %v705, 1
        %v822 = vrot.slane %v785, 1
        %v823 = vsel %vm469, %v821, %v822
        %v824 = vrot.slane %v706, 1
        %v825 = vrot.slane %v786, 1
        %v826 = vsel %vm469, %v824, %v825
        %v827 = vrot.slane %v707, 1
        %v828 = vrot.slane %v787, 1
        %v829 = vsel %vm469, %v827, %v828
        %v830 = vrot.slane %v708, 1
        %v831 = vrot.slane %v788, 1
        %v832 = vsel %vm469, %v830, %v831
        %v833 = vrot.slane %v709, 1
        %v834 = vrot.slane %v789, 1
        %v835 = vsel %vm469, %v833, %v834
        %v836 = vrot.slane %v710, 1
        %v837 = vrot.slane %v790, 1
        %v838 = vsel %vm469, %v836, %v837
        %839 = vrot.lane.b32.xlu0 %v793, 16
        %v840 = vpop.permute.xlu0 %839
        %841 = vrot.lane.b32.xlu0 %v796, 16
        %v842 = vpop.permute.xlu0 %841
        %843 = vrot.lane.b32.xlu0 %v799, 16
        %v844 = vpop.permute.xlu0 %843
        %845 = vrot.lane.b32.xlu0 %v802, 16
        %v846 = vpop.permute.xlu0 %845
        %847 = vrot.lane.b32.xlu0 %v805, 16
        %v848 = vpop.permute.xlu0 %847
        %849 = vrot.lane.b32.xlu0 %v808, 16
        %v850 = vpop.permute.xlu0 %849
        %851 = vrot.lane.b32.xlu0 %v811, 16
        %v852 = vpop.permute.xlu0 %851
        %853 = vrot.lane.b32.xlu0 %v814, 16
        %v854 = vpop.permute.xlu0 %853
        %855 = vrot.lane.b32.xlu0 %v817, 16
        %v856 = vpop.permute.xlu0 %855
        %857 = vrot.lane.b32.xlu0 %v820, 16
        %v858 = vpop.permute.xlu0 %857
        %859 = vrot.lane.b32.xlu0 %v823, 16
        %v860 = vpop.permute.xlu0 %859
        %861 = vrot.lane.b32.xlu0 %v826, 16
        %v862 = vpop.permute.xlu0 %861
        %863 = vrot.lane.b32.xlu0 %v829, 16
        %v864 = vpop.permute.xlu0 %863
        %865 = vrot.lane.b32.xlu0 %v832, 16
        %v866 = vpop.permute.xlu0 %865
        %867 = vrot.lane.b32.xlu0 %v835, 16
        %v868 = vpop.permute.xlu0 %867
        %869 = vrot.lane.b32.xlu0 %v838, 16
        %v870 = vpop.permute.xlu0 %869
        %v871 = vrot.slane %v695, 2
        %v872 = vrot.slane %v775, 2
        %v873 = vsel %vm550, %v871, %v872
        %v874 = vrot.slane %v696, 2
        %v875 = vrot.slane %v776, 2
        %v876 = vsel %vm550, %v874, %v875
        %v877 = vrot.slane %v697, 2
        %v878 = vrot.slane %v777, 2
        %v879 = vsel %vm550, %v877, %v878
        %v880 = vrot.slane %v698, 2
        %v881 = vrot.slane %v778, 2
        %v882 = vsel %vm550, %v880, %v881
        %v883 = vrot.slane %v699, 2
        %v884 = vrot.slane %v779, 2
        %v885 = vsel %vm550, %v883, %v884
        %v886 = vrot.slane %v700, 2
        %v887 = vrot.slane %v780, 2
        %v888 = vsel %vm550, %v886, %v887
        %v889 = vrot.slane %v701, 2
        %v890 = vrot.slane %v781, 2
        %v891 = vsel %vm550, %v889, %v890
        %v892 = vrot.slane %v702, 2
        %v893 = vrot.slane %v782, 2
        %v894 = vsel %vm550, %v892, %v893
        %v895 = vrot.slane %v703, 2
        %v896 = vrot.slane %v783, 2
        %v897 = vsel %vm550, %v895, %v896
        %v898 = vrot.slane %v704, 2
        %v899 = vrot.slane %v784, 2
        %v900 = vsel %vm550, %v898, %v899
        %v901 = vrot.slane %v705, 2
        %v902 = vrot.slane %v785, 2
        %v903 = vsel %vm550, %v901, %v902
        %v904 = vrot.slane %v706, 2
        %v905 = vrot.slane %v786, 2
        %v906 = vsel %vm550, %v904, %v905
        %v907 = vrot.slane %v707, 2
        %v908 = vrot.slane %v787, 2
        %v909 = vsel %vm550, %v907, %v908
        %v910 = vrot.slane %v708, 2
        %v911 = vrot.slane %v788, 2
        %v912 = vsel %vm550, %v910, %v911
        %v913 = vrot.slane %v709, 2
        %v914 = vrot.slane %v789, 2
        %v915 = vsel %vm550, %v913, %v914
        %v916 = vrot.slane %v710, 2
        %v917 = vrot.slane %v790, 2
        %v918 = vsel %vm550, %v916, %v917
        %919 = vrot.lane.b32.xlu0 %v873, 20
        %v920 = vpop.permute.xlu0 %919
        %921 = vrot.lane.b32.xlu0 %v876, 20
        %v922 = vpop.permute.xlu0 %921
        %923 = vrot.lane.b32.xlu0 %v879, 20
        %v924 = vpop.permute.xlu0 %923
        %925 = vrot.lane.b32.xlu0 %v882, 20
        %v926 = vpop.permute.xlu0 %925
        %927 = vrot.lane.b32.xlu0 %v885, 20
        %v928 = vpop.permute.xlu0 %927
        %929 = vrot.lane.b32.xlu0 %v888, 20
        %v930 = vpop.permute.xlu0 %929
        %931 = vrot.lane.b32.xlu0 %v891, 20
        %v932 = vpop.permute.xlu0 %931
        %933 = vrot.lane.b32.xlu0 %v894, 20
        %v934 = vpop.permute.xlu0 %933
        %935 = vrot.lane.b32.xlu0 %v897, 20
        %v936 = vpop.permute.xlu0 %935
        %937 = vrot.lane.b32.xlu0 %v900, 20
        %v938 = vpop.permute.xlu0 %937
        %939 = vrot.lane.b32.xlu0 %v903, 20
        %v940 = vpop.permute.xlu0 %939
        %941 = vrot.lane.b32.xlu0 %v906, 20
        %v942 = vpop.permute.xlu0 %941
        %943 = vrot.lane.b32.xlu0 %v909, 20
        %v944 = vpop.permute.xlu0 %943
        %945 = vrot.lane.b32.xlu0 %v912, 20
        %v946 = vpop.permute.xlu0 %945
        %947 = vrot.lane.b32.xlu0 %v915, 20
        %v948 = vpop.permute.xlu0 %947
        %949 = vrot.lane.b32.xlu0 %v918, 20
        %v950 = vpop.permute.xlu0 %949
        %v983 = vunpack.c.l.b16 %v293
        %v984 = vunpack.c.l.b16 %v294
        %v985 = vunpack.c.l.b16 %v296
        %v986 = vunpack.c.l.b16 %v297
        %v987 = vunpack.c.l.b16 %v299
        %v988 = vunpack.c.l.b16 %v300
        %v989 = vunpack.c.l.b16 %v302
        %v990 = vunpack.c.l.b16 %v303
        %v991 = vunpack.c.l.b16 %v305
        %v992 = vunpack.c.l.b16 %v306
        %v993 = vunpack.c.l.b16 %v308
        %v994 = vunpack.c.l.b16 %v309
        %v995 = vunpack.c.l.b16 %v311
        %v996 = vunpack.c.l.b16 %v312
        %v997 = vunpack.c.l.b16 %v314
        %v998 = vunpack.c.l.b16 %v315
        %v999 = vunpack.c.l.b16 %v317
        %v1000 = vunpack.c.l.b16 %v318
        %v1001 = vunpack.c.l.b16 %v320
        %v1002 = vunpack.c.l.b16 %v321
        %v1003 = vunpack.c.l.b16 %v323
        %v1004 = vunpack.c.l.b16 %v324
        %v1005 = vunpack.c.l.b16 %v326
        %v1006 = vunpack.c.l.b16 %v327
        %v1007 = vunpack.c.l.b16 %v329
        %v1008 = vunpack.c.l.b16 %v330
        %v1009 = vunpack.c.l.b16 %v332
        %v1010 = vunpack.c.l.b16 %v333
        %v1011 = vunpack.c.l.b16 %v335
        %v1012 = vunpack.c.l.b16 %v336
        %v1013 = vunpack.c.l.b16 %v338
        %v1014 = vunpack.c.l.b16 %v339
        %v1015 = vpack.c.b16 %v984, %v983
        %v1016 = vpack.c.b16 %v986, %v985
        %v1017 = vpack.c.b16 %v988, %v987
        %v1018 = vpack.c.b16 %v990, %v989
        %v1019 = vpack.c.b16 %v992, %v991
        %v1020 = vpack.c.b16 %v994, %v993
        %v1021 = vpack.c.b16 %v996, %v995
        %v1022 = vpack.c.b16 %v998, %v997
        %v1023 = vpack.c.b16 %v1000, %v999
        %v1024 = vpack.c.b16 %v1002, %v1001
        %v1025 = vpack.c.b16 %v1004, %v1003
        %v1026 = vpack.c.b16 %v1006, %v1005
        %v1027 = vpack.c.b16 %v1008, %v1007
        %v1028 = vpack.c.b16 %v1010, %v1009
        %v1029 = vpack.c.b16 %v1012, %v1011
        %v1030 = vpack.c.b16 %v1014, %v1013
        %1031 = vrot.lane.b32.xlu0 %v1015, 24
        %v1032 = vpop.permute.xlu0 %1031
        %1033 = vrot.lane.b32.xlu0 %v1016, 24
        %v1034 = vpop.permute.xlu0 %1033
        %1035 = vrot.lane.b32.xlu0 %v1017, 24
        %v1036 = vpop.permute.xlu0 %1035
        %1037 = vrot.lane.b32.xlu0 %v1018, 24
        %v1038 = vpop.permute.xlu0 %1037
        %1039 = vrot.lane.b32.xlu0 %v1019, 24
        %v1040 = vpop.permute.xlu0 %1039
        %1041 = vrot.lane.b32.xlu0 %v1020, 24
        %v1042 = vpop.permute.xlu0 %1041
        %1043 = vrot.lane.b32.xlu0 %v1021, 24
        %v1044 = vpop.permute.xlu0 %1043
        %1045 = vrot.lane.b32.xlu0 %v1022, 24
        %v1046 = vpop.permute.xlu0 %1045
        %1047 = vrot.lane.b32.xlu0 %v1023, 24
        %v1048 = vpop.permute.xlu0 %1047
        %1049 = vrot.lane.b32.xlu0 %v1024, 24
        %v1050 = vpop.permute.xlu0 %1049
        %1051 = vrot.lane.b32.xlu0 %v1025, 24
        %v1052 = vpop.permute.xlu0 %1051
        %1053 = vrot.lane.b32.xlu0 %v1026, 24
        %v1054 = vpop.permute.xlu0 %1053
        %1055 = vrot.lane.b32.xlu0 %v1027, 24
        %v1056 = vpop.permute.xlu0 %1055
        %1057 = vrot.lane.b32.xlu0 %v1028, 24
        %v1058 = vpop.permute.xlu0 %1057
        %1059 = vrot.lane.b32.xlu0 %v1029, 24
        %v1060 = vpop.permute.xlu0 %1059
        %1061 = vrot.lane.b32.xlu0 %v1030, 24
        %v1062 = vpop.permute.xlu0 %1061
        %v1079 = vunpack.c.l.b16 %v295
        %v1080 = vunpack.c.l.b16 %v298
        %v1081 = vunpack.c.l.b16 %v301
        %v1082 = vunpack.c.l.b16 %v304
        %v1083 = vunpack.c.l.b16 %v307
        %v1084 = vunpack.c.l.b16 %v310
        %v1085 = vunpack.c.l.b16 %v313
        %v1086 = vunpack.c.l.b16 %v316
        %v1087 = vunpack.c.l.b16 %v319
        %v1088 = vunpack.c.l.b16 %v322
        %v1089 = vunpack.c.l.b16 %v325
        %v1090 = vunpack.c.l.b16 %v328
        %v1091 = vunpack.c.l.b16 %v331
        %v1092 = vunpack.c.l.b16 %v334
        %v1093 = vunpack.c.l.b16 %v337
        %v1094 = vunpack.c.l.b16 %v340
        %v1095 = vpack.c.b16 %v1079, %v1079
        %v1096 = vpack.c.b16 %v1080, %v1080
        %v1097 = vpack.c.b16 %v1081, %v1081
        %v1098 = vpack.c.b16 %v1082, %v1082
        %v1099 = vpack.c.b16 %v1083, %v1083
        %v1100 = vpack.c.b16 %v1084, %v1084
        %v1101 = vpack.c.b16 %v1085, %v1085
        %v1102 = vpack.c.b16 %v1086, %v1086
        %v1103 = vpack.c.b16 %v1087, %v1087
        %v1104 = vpack.c.b16 %v1088, %v1088
        %v1105 = vpack.c.b16 %v1089, %v1089
        %v1106 = vpack.c.b16 %v1090, %v1090
        %v1107 = vpack.c.b16 %v1091, %v1091
        %v1108 = vpack.c.b16 %v1092, %v1092
        %v1109 = vpack.c.b16 %v1093, %v1093
        %v1110 = vpack.c.b16 %v1094, %v1094
        %v1111 = vrot.slane %v1015, 1
        %v1112 = vrot.slane %v1095, 1
        %v1113 = vsel %vm469, %v1111, %v1112
        %v1114 = vrot.slane %v1016, 1
        %v1115 = vrot.slane %v1096, 1
        %v1116 = vsel %vm469, %v1114, %v1115
        %v1117 = vrot.slane %v1017, 1
        %v1118 = vrot.slane %v1097, 1
        %v1119 = vsel %vm469, %v1117, %v1118
        %v1120 = vrot.slane %v1018, 1
        %v1121 = vrot.slane %v1098, 1
        %v1122 = vsel %vm469, %v1120, %v1121
        %v1123 = vrot.slane %v1019, 1
        %v1124 = vrot.slane %v1099, 1
        %v1125 = vsel %vm469, %v1123, %v1124
        %v1126 = vrot.slane %v1020, 1
        %v1127 = vrot.slane %v1100, 1
        %v1128 = vsel %vm469, %v1126, %v1127
        %v1129 = vrot.slane %v1021, 1
        %v1130 = vrot.slane %v1101, 1
        %v1131 = vsel %vm469, %v1129, %v1130
        %v1132 = vrot.slane %v1022, 1
        %v1133 = vrot.slane %v1102, 1
        %v1134 = vsel %vm469, %v1132, %v1133
        %v1135 = vrot.slane %v1023, 1
        %v1136 = vrot.slane %v1103, 1
        %v1137 = vsel %vm469, %v1135, %v1136
        %v1138 = vrot.slane %v1024, 1
        %v1139 = vrot.slane %v1104, 1
        %v1140 = vsel %vm469, %v1138, %v1139
        %v1141 = vrot.slane %v1025, 1
        %v1142 = vrot.slane %v1105, 1
        %v1143 = vsel %vm469, %v1141, %v1142
        %v1144 = vrot.slane %v1026, 1
        %v1145 = vrot.slane %v1106, 1
        %v1146 = vsel %vm469, %v1144, %v1145
        %v1147 = vrot.slane %v1027, 1
        %v1148 = vrot.slane %v1107, 1
        %v1149 = vsel %vm469, %v1147, %v1148
        %v1150 = vrot.slane %v1028, 1
        %v1151 = vrot.slane %v1108, 1
        %v1152 = vsel %vm469, %v1150, %v1151
        %v1153 = vrot.slane %v1029, 1
        %v1154 = vrot.slane %v1109, 1
        %v1155 = vsel %vm469, %v1153, %v1154
        %v1156 = vrot.slane %v1030, 1
        %v1157 = vrot.slane %v1110, 1
        %v1158 = vsel %vm469, %v1156, %v1157
        %1159 = vrot.lane.b32.xlu0 %v1113, 28
        %v1160 = vpop.permute.xlu0 %1159
        %1161 = vrot.lane.b32.xlu0 %v1116, 28
        %v1162 = vpop.permute.xlu0 %1161
        %1163 = vrot.lane.b32.xlu0 %v1119, 28
        %v1164 = vpop.permute.xlu0 %1163
        %1165 = vrot.lane.b32.xlu0 %v1122, 28
        %v1166 = vpop.permute.xlu0 %1165
        %1167 = vrot.lane.b32.xlu0 %v1125, 28
        %v1168 = vpop.permute.xlu0 %1167
        %1169 = vrot.lane.b32.xlu0 %v1128, 28
        %v1170 = vpop.permute.xlu0 %1169
        %1171 = vrot.lane.b32.xlu0 %v1131, 28
        %v1172 = vpop.permute.xlu0 %1171
        %1173 = vrot.lane.b32.xlu0 %v1134, 28
        %v1174 = vpop.permute.xlu0 %1173
        %1175 = vrot.lane.b32.xlu0 %v1137, 28
        %v1176 = vpop.permute.xlu0 %1175
        %1177 = vrot.lane.b32.xlu0 %v1140, 28
        %v1178 = vpop.permute.xlu0 %1177
        %1179 = vrot.lane.b32.xlu0 %v1143, 28
        %v1180 = vpop.permute.xlu0 %1179
        %1181 = vrot.lane.b32.xlu0 %v1146, 28
        %v1182 = vpop.permute.xlu0 %1181
        %1183 = vrot.lane.b32.xlu0 %v1149, 28
        %v1184 = vpop.permute.xlu0 %1183
        %1185 = vrot.lane.b32.xlu0 %v1152, 28
        %v1186 = vpop.permute.xlu0 %1185
        %1187 = vrot.lane.b32.xlu0 %v1155, 28
        %v1188 = vpop.permute.xlu0 %1187
        %1189 = vrot.lane.b32.xlu0 %v1158, 28
        %v1190 = vpop.permute.xlu0 %1189
        %v1191 = vrot.slane %v1015, 2
        %v1192 = vrot.slane %v1095, 2
        %v1193 = vsel %vm550, %v1191, %v1192
        %v1194 = vrot.slane %v1016, 2
        %v1195 = vrot.slane %v1096, 2
        %v1196 = vsel %vm550, %v1194, %v1195
        %v1197 = vrot.slane %v1017, 2
        %v1198 = vrot.slane %v1097, 2
        %v1199 = vsel %vm550, %v1197, %v1198
        %v1200 = vrot.slane %v1018, 2
        %v1201 = vrot.slane %v1098, 2
        %v1202 = vsel %vm550, %v1200, %v1201
        %v1203 = vrot.slane %v1019, 2
        %v1204 = vrot.slane %v1099, 2
        %v1205 = vsel %vm550, %v1203, %v1204
        %v1206 = vrot.slane %v1020, 2
        %v1207 = vrot.slane %v1100, 2
        %v1208 = vsel %vm550, %v1206, %v1207
        %v1209 = vrot.slane %v1021, 2
        %v1210 = vrot.slane %v1101, 2
        %v1211 = vsel %vm550, %v1209, %v1210
        %v1212 = vrot.slane %v1022, 2
        %v1213 = vrot.slane %v1102, 2
        %v1214 = vsel %vm550, %v1212, %v1213
        %v1215 = vrot.slane %v1023, 2
        %v1216 = vrot.slane %v1103, 2
        %v1217 = vsel %vm550, %v1215, %v1216
        %v1218 = vrot.slane %v1024, 2
        %v1219 = vrot.slane %v1104, 2
        %v1220 = vsel %vm550, %v1218, %v1219
        %v1221 = vrot.slane %v1025, 2
        %v1222 = vrot.slane %v1105, 2
        %v1223 = vsel %vm550, %v1221, %v1222
        %v1224 = vrot.slane %v1026, 2
        %v1225 = vrot.slane %v1106, 2
        %v1226 = vsel %vm550, %v1224, %v1225
        %v1227 = vrot.slane %v1027, 2
        %v1228 = vrot.slane %v1107, 2
        %v1229 = vsel %vm550, %v1227, %v1228
        %v1230 = vrot.slane %v1028, 2
        %v1231 = vrot.slane %v1108, 2
        %v1232 = vsel %vm550, %v1230, %v1231
        %v1233 = vrot.slane %v1029, 2
        %v1234 = vrot.slane %v1109, 2
        %v1235 = vsel %vm550, %v1233, %v1234
        %v1236 = vrot.slane %v1030, 2
        %v1237 = vrot.slane %v1110, 2
        %v1238 = vsel %vm550, %v1236, %v1237
        %1239 = vrot.lane.b32.xlu0 %v1193, 32
        %v1240 = vpop.permute.xlu0 %1239
        %1241 = vrot.lane.b32.xlu0 %v1196, 32
        %v1242 = vpop.permute.xlu0 %1241
        %1243 = vrot.lane.b32.xlu0 %v1199, 32
        %v1244 = vpop.permute.xlu0 %1243
        %1245 = vrot.lane.b32.xlu0 %v1202, 32
        %v1246 = vpop.permute.xlu0 %1245
        %1247 = vrot.lane.b32.xlu0 %v1205, 32
        %v1248 = vpop.permute.xlu0 %1247
        %1249 = vrot.lane.b32.xlu0 %v1208, 32
        %v1250 = vpop.permute.xlu0 %1249
        %1251 = vrot.lane.b32.xlu0 %v1211, 32
        %v1252 = vpop.permute.xlu0 %1251
        %1253 = vrot.lane.b32.xlu0 %v1214, 32
        %v1254 = vpop.permute.xlu0 %1253
        %1255 = vrot.lane.b32.xlu0 %v1217, 32
        %v1256 = vpop.permute.xlu0 %1255
        %1257 = vrot.lane.b32.xlu0 %v1220, 32
        %v1258 = vpop.permute.xlu0 %1257
        %1259 = vrot.lane.b32.xlu0 %v1223, 32
        %v1260 = vpop.permute.xlu0 %1259
        %1261 = vrot.lane.b32.xlu0 %v1226, 32
        %v1262 = vpop.permute.xlu0 %1261
        %1263 = vrot.lane.b32.xlu0 %v1229, 32
        %v1264 = vpop.permute.xlu0 %1263
        %1265 = vrot.lane.b32.xlu0 %v1232, 32
        %v1266 = vpop.permute.xlu0 %1265
        %1267 = vrot.lane.b32.xlu0 %v1235, 32
        %v1268 = vpop.permute.xlu0 %1267
        %1269 = vrot.lane.b32.xlu0 %v1238, 32
        %v1270 = vpop.permute.xlu0 %1269
        %vm1271 = vcmask 31744
        %v1274 = vsel %vm1271, %v405, %v519
        %v1277 = vsel %vm1271, %v406, %v521
        %v1280 = vsel %vm1271, %v407, %v523
        %v1283 = vsel %vm1271, %v408, %v525
        %v1286 = vsel %vm1271, %v409, %v527
        %v1289 = vsel %vm1271, %v410, %v529
        %v1292 = vsel %vm1271, %v411, %v531
        %v1295 = vsel %vm1271, %v412, %v533
        %v1298 = vsel %vm1271, %v413, %v535
        %v1301 = vsel %vm1271, %v414, %v537
        %v1304 = vsel %vm1271, %v415, %v539
        %v1307 = vsel %vm1271, %v416, %v541
        %v1310 = vsel %vm1271, %v417, %v543
        %v1313 = vsel %vm1271, %v418, %v545
        %v1316 = vsel %vm1271, %v419, %v547
        %v1319 = vsel %vm1271, %v420, %v549
        %vm1320 = vcmask 64512
        %v1322 = vsel %vm1320, %v1274, %v600
        %v1324 = vsel %vm1320, %v1277, %v602
        %v1326 = vsel %vm1320, %v1280, %v604
        %v1328 = vsel %vm1320, %v1283, %v606
        %v1330 = vsel %vm1320, %v1286, %v608
        %v1332 = vsel %vm1320, %v1289, %v610
        %v1334 = vsel %vm1320, %v1292, %v612
        %v1336 = vsel %vm1320, %v1295, %v614
        %v1338 = vsel %vm1320, %v1298, %v616
        %v1340 = vsel %vm1320, %v1301, %v618
        %v1342 = vsel %vm1320, %v1304, %v620
        %v1344 = vsel %vm1320, %v1307, %v622
        %v1346 = vsel %vm1320, %v1310, %v624
        %v1348 = vsel %vm1320, %v1313, %v626
        %v1350 = vsel %vm1320, %v1316, %v628
        %v1352 = vsel %vm1320, %v1319, %v630
        %vm1353 = vcmask 97280
        %v1355 = vsel %vm1353, %v1322, %v712
        %v1357 = vsel %vm1353, %v1324, %v714
        %v1359 = vsel %vm1353, %v1326, %v716
        %v1361 = vsel %vm1353, %v1328, %v718
        %v1363 = vsel %vm1353, %v1330, %v720
        %v1365 = vsel %vm1353, %v1332, %v722
        %v1367 = vsel %vm1353, %v1334, %v724
        %v1369 = vsel %vm1353, %v1336, %v726
        %v1371 = vsel %vm1353, %v1338, %v728
        %v1373 = vsel %vm1353, %v1340, %v730
        %v1375 = vsel %vm1353, %v1342, %v732
        %v1377 = vsel %vm1353, %v1344, %v734
        %v1379 = vsel %vm1353, %v1346, %v736
        %v1381 = vsel %vm1353, %v1348, %v738
        %v1383 = vsel %vm1353, %v1350, %v740
        %v1385 = vsel %vm1353, %v1352, %v742
        %vm1386 = vcmask 130048
        %v1388 = vsel %vm1386, %v1355, %v840
        %v1390 = vsel %vm1386, %v1357, %v842
        %v1392 = vsel %vm1386, %v1359, %v844
        %v1394 = vsel %vm1386, %v1361, %v846
        %v1396 = vsel %vm1386, %v1363, %v848
        %v1398 = vsel %vm1386, %v1365, %v850
        %v1400 = vsel %vm1386, %v1367, %v852
        %v1402 = vsel %vm1386, %v1369, %v854
        %v1404 = vsel %vm1386, %v1371, %v856
        %v1406 = vsel %vm1386, %v1373, %v858
        %v1408 = vsel %vm1386, %v1375, %v860
        %v1410 = vsel %vm1386, %v1377, %v862
        %v1412 = vsel %vm1386, %v1379, %v864
        %v1414 = vsel %vm1386, %v1381, %v866
        %v1416 = vsel %vm1386, %v1383, %v868
        %v1418 = vsel %vm1386, %v1385, %v870
        %vm1419 = vcmask 162816
        %v1421 = vsel %vm1419, %v1388, %v920
        %v1423 = vsel %vm1419, %v1390, %v922
        %v1425 = vsel %vm1419, %v1392, %v924
        %v1427 = vsel %vm1419, %v1394, %v926
        %v1429 = vsel %vm1419, %v1396, %v928
        %v1431 = vsel %vm1419, %v1398, %v930
        %v1433 = vsel %vm1419, %v1400, %v932
        %v1435 = vsel %vm1419, %v1402, %v934
        %v1437 = vsel %vm1419, %v1404, %v936
        %v1439 = vsel %vm1419, %v1406, %v938
        %v1441 = vsel %vm1419, %v1408, %v940
        %v1443 = vsel %vm1419, %v1410, %v942
        %v1445 = vsel %vm1419, %v1412, %v944
        %v1447 = vsel %vm1419, %v1414, %v946
        %v1449 = vsel %vm1419, %v1416, %v948
        %v1451 = vsel %vm1419, %v1418, %v950
        %vm1452 = vcmask 195584
        %v1454 = vsel %vm1452, %v1421, %v1032
        %v1456 = vsel %vm1452, %v1423, %v1034
        %v1458 = vsel %vm1452, %v1425, %v1036
        %v1460 = vsel %vm1452, %v1427, %v1038
        %v1462 = vsel %vm1452, %v1429, %v1040
        %v1464 = vsel %vm1452, %v1431, %v1042
        %v1466 = vsel %vm1452, %v1433, %v1044
        %v1468 = vsel %vm1452, %v1435, %v1046
        %v1470 = vsel %vm1452, %v1437, %v1048
        %v1472 = vsel %vm1452, %v1439, %v1050
        %v1474 = vsel %vm1452, %v1441, %v1052
        %v1476 = vsel %vm1452, %v1443, %v1054
        %v1478 = vsel %vm1452, %v1445, %v1056
        %v1480 = vsel %vm1452, %v1447, %v1058
        %v1482 = vsel %vm1452, %v1449, %v1060
        %v1484 = vsel %vm1452, %v1451, %v1062
        %vm1485 = vcmask 228352
        %v1487 = vsel %vm1485, %v1454, %v1160
        %v1489 = vsel %vm1485, %v1456, %v1162
        %v1491 = vsel %vm1485, %v1458, %v1164
        %v1493 = vsel %vm1485, %v1460, %v1166
        %v1495 = vsel %vm1485, %v1462, %v1168
        %v1497 = vsel %vm1485, %v1464, %v1170
        %v1499 = vsel %vm1485, %v1466, %v1172
        %v1501 = vsel %vm1485, %v1468, %v1174
        %v1503 = vsel %vm1485, %v1470, %v1176
        %v1505 = vsel %vm1485, %v1472, %v1178
        %v1507 = vsel %vm1485, %v1474, %v1180
        %v1509 = vsel %vm1485, %v1476, %v1182
        %v1511 = vsel %vm1485, %v1478, %v1184
        %v1513 = vsel %vm1485, %v1480, %v1186
        %v1515 = vsel %vm1485, %v1482, %v1188
        %v1517 = vsel %vm1485, %v1484, %v1190
        %vm1518 = vcmask 261120
        %v1520 = vsel %vm1518, %v1487, %v1240
        %v1522 = vsel %vm1518, %v1489, %v1242
        %v1524 = vsel %vm1518, %v1491, %v1244
        %v1526 = vsel %vm1518, %v1493, %v1246
        %v1528 = vsel %vm1518, %v1495, %v1248
        %v1530 = vsel %vm1518, %v1497, %v1250
        %v1532 = vsel %vm1518, %v1499, %v1252
        %v1534 = vsel %vm1518, %v1501, %v1254
        %v1536 = vsel %vm1518, %v1503, %v1256
        %v1538 = vsel %vm1518, %v1505, %v1258
        %v1540 = vsel %vm1518, %v1507, %v1260
        %v1542 = vsel %vm1518, %v1509, %v1262
        %v1544 = vsel %vm1518, %v1511, %v1264
        %v1546 = vsel %vm1518, %v1513, %v1266
        %v1548 = vsel %vm1518, %v1515, %v1268
        %v1550 = vsel %vm1518, %v1517, %v1270
        %v1551 = vld [vmem:[%s1] sm:$0xff]
        %v1552 = vld [vmem:[%s1 + $0x8] sm:$0xff]
        %v1553 = vld [vmem:[%s1 + $0x10] sm:$0xff]
        %v1554 = vld [vmem:[%s1 + $0x18] sm:$0xff]
        %v1555 = vld [vmem:[%s1 + $0x20] sm:$0x33]
        %v1556 = vld [vmem:[%s2] sm:$0x3]
        %v1558 = vlaneseq
        %v1559 = vshrl.u32 %v1558, 7
        %v1560 = vsub.s32 0, %v1559
        %v1561 = vrot.slane %v1556, %v1560
        %v1562 = vlaneseq
        %v1563 = vshrl.u32 %v1562, 7
        %v1564 = vsub.s32 1, %v1563
        %v1565 = vrot.slane %v1556, %v1564
        %v1573 = vunpack.c.l.b16 %v1551
        %v1574 = vunpack.c.h.b16 %v1551
        %v1575 = vunpack.c.l.b16 %v1552
        %v1576 = vunpack.c.h.b16 %v1552
        %v1577 = vunpack.c.l.b16 %v1553
        %v1578 = vunpack.c.h.b16 %v1553
        %v1579 = vunpack.c.l.b16 %v1554
        %v1580 = vunpack.c.h.b16 %v1554
        %v1581 = vunpack.c.l.b16 %v1555
        %v1582 = vunpack.c.h.b16 %v1555
        %v1583 = vpack.c.b16 %v1575, %v1573
        %v1584 = vpack.c.b16 %v1576, %v1574
        %v1585 = vpack.c.b16 %v1579, %v1577
        %v1586 = vpack.c.b16 %v1580, %v1578
        %v1587 = vpack.c.b16 %v1581, %v1581
        %v1588 = vpack.c.b16 %v1582, %v1582
        %vm1593 = vcmask 293888
        %v1594 = vsel %vm1593, %v1520, 0
        %v1596 = vsel %vm1593, %v1522, 0
        %v1598 = vsel %vm1593, %v1524, 0
        %v1600 = vsel %vm1593, %v1526, 0
        %v1602 = vsel %vm1593, %v1528, 0
        %v1604 = vsel %vm1593, %v1530, 0
        %v1606 = vsel %vm1593, %v1532, 0
        %v1608 = vsel %vm1593, %v1534, 0
        %v1610 = vsel %vm1593, %v1536, 0
        %v1612 = vsel %vm1593, %v1538, 0
        %v1614 = vsel %vm1593, %v1540, 0
        %v1616 = vsel %vm1593, %v1542, 0
        %v1618 = vsel %vm1593, %v1544, 0
        %v1620 = vsel %vm1593, %v1546, 0
        %v1622 = vsel %vm1593, %v1548, 0
        %v1624 = vsel %vm1593, %v1550, 0
        %vm1626 = vcmask 1041408
        %v1628 = vsel %vm1626, %v1587, 0
        %v1631 = vsel %vm1626, %v1588, 0
        %1633 = vmatprep.subr.bf16.mxu0 %v1584
        %1634 = vmatpush1.bf16.msra.mxu0 %v1583
        %1635 = vmatprep.subr.bf16.mxu0 %v1586
        %1636 = vmatpush1.bf16.msra.mxu0 %v1585
        %1637 = vmatprep.subr.bf16.mxu0 %v1631
        %1638 = vmatpush1.bf16.msra.mxu0 %v1628
        %1639 = vmatprep.subr.bf16.mxu0 0
        %1640 = vmatpush1.bf16.msra.mxu0 0
        %1641 = vmatprep.subr.bf16.mxu0 0
        %1642 = vmatpush1.bf16.msra.mxu0 0
        %1643 = vmatprep.subr.bf16.mxu0 0
        %1644 = vmatpush1.bf16.msra.mxu0 0
        %1645 = vmatprep.subr.bf16.mxu0 0
        %1646 = vmatpush1.bf16.msra.mxu0 0
        %1647 = vmatprep.subr.bf16.mxu0 0
        %1648 = vmatpush1.bf16.msra.mxu0 0
        %1649 = vmatprep.subr.bf16.mxu0 0
        %1650 = vmatpush1.bf16.msra.mxu0 0
        %1651 = vmatprep.subr.bf16.mxu0 0
        %1652 = vmatpush1.bf16.msra.mxu0 0
        %1653 = vmatprep.subr.bf16.mxu0 0
        %1654 = vmatpush1.bf16.msra.mxu0 0
        %1655 = vmatprep.subr.bf16.mxu0 0
        %1656 = vmatpush1.bf16.msra.mxu0 0
        %1657 = vmatprep.subr.bf16.mxu0 0
        %1658 = vmatpush1.bf16.msra.mxu0 0
        %1659 = vmatprep.subr.bf16.mxu0 0
        %1660 = vmatpush1.bf16.msra.mxu0 0
        %1661 = vmatprep.subr.bf16.mxu0 0
        %1662 = vmatpush1.bf16.msra.mxu0 0
        %1663 = vmatprep.subr.bf16.mxu0 0
        %1664 = vmatpush1.bf16.msra.mxu0 0
        %1665 = vmatprep.mubr.bf16.mxu0 0
        %1666 = vmatmul.mubr.bf16.gmra.mrb[0].mxu0 %v1594
        %v1667 = vpop.f32.mrb[0].mxu0
        %v1668 = vadd.f32 %v1561, %v1667
        %v1669 = vpop.f32.mrb[0].mxu0
        %v1670 = vadd.f32 %v1565, %v1669
        %v1671 = vpop.f32.mrb[0].mxu0
        %v1672 = vadd.f32 %v1561, %v1671
        %v1673 = vpop.f32.mrb[0].mxu0
        %v1674 = vadd.f32 %v1565, %v1673
        %1675 = vmatprep.mubr.bf16.mxu0 0
        %1676 = vmatmul.mubr.bf16.gmra.mrb[0].mxu0 %v1596
        %v1677 = vpop.f32.mrb[0].mxu0
        %v1678 = vadd.f32 %v1561, %v1677
        %v1679 = vpop.f32.mrb[0].mxu0
        %v1680 = vadd.f32 %v1565, %v1679
        %v1681 = vpop.f32.mrb[0].mxu0
        %v1682 = vadd.f32 %v1561, %v1681
        %v1683 = vpop.f32.mrb[0].mxu0
        %v1684 = vadd.f32 %v1565, %v1683
        %1685 = vmatprep.mubr.bf16.mxu0 0
        %1686 = vmatmul.mubr.bf16.gmra.mrb[0].mxu0 %v1598
        %v1687 = vpop.f32.mrb[0].mxu0
        %v1688 = vadd.f32 %v1561, %v1687
        %v1689 = vpop.f32.mrb[0].mxu0
        %v1690 = vadd.f32 %v1565, %v1689
        %v1691 = vpop.f32.mrb[0].mxu0
        %v1692 = vadd.f32 %v1561, %v1691
        %v1693 = vpop.f32.mrb[0].mxu0
        %v1694 = vadd.f32 %v1565, %v1693
        %1695 = vmatprep.mubr.bf16.mxu0 0
        %1696 = vmatmul.mubr.bf16.gmra.mrb[0].mxu0 %v1600
        %v1697 = vpop.f32.mrb[0].mxu0
        %v1698 = vadd.f32 %v1561, %v1697
        %v1699 = vpop.f32.mrb[0].mxu0
        %v1700 = vadd.f32 %v1565, %v1699
        %v1701 = vpop.f32.mrb[0].mxu0
        %v1702 = vadd.f32 %v1561, %v1701
        %v1703 = vpop.f32.mrb[0].mxu0
        %v1704 = vadd.f32 %v1565, %v1703
        %1705 = vmatprep.mubr.bf16.mxu0 0
        %1706 = vmatmul.mubr.bf16.gmra.mrb[0].mxu0 %v1602
        %v1707 = vpop.f32.mrb[0].mxu0
        %v1708 = vadd.f32 %v1561, %v1707
        %v1709 = vpop.f32.mrb[0].mxu0
        %v1710 = vadd.f32 %v1565, %v1709
        %v1711 = vpop.f32.mrb[0].mxu0
        %v1712 = vadd.f32 %v1561, %v1711
        %v1713 = vpop.f32.mrb[0].mxu0
        %v1714 = vadd.f32 %v1565, %v1713
        %1715 = vmatprep.mubr.bf16.mxu0 0
        %1716 = vmatmul.mubr.bf16.gmra.mrb[0].mxu0 %v1604
        %v1717 = vpop.f32.mrb[0].mxu0
        %v1718 = vadd.f32 %v1561, %v1717
        %v1719 = vpop.f32.mrb[0].mxu0
        %v1720 = vadd.f32 %v1565, %v1719
        %v1721 = vpop.f32.mrb[0].mxu0
        %v1722 = vadd.f32 %v1561, %v1721
        %v1723 = vpop.f32.mrb[0].mxu0
        %v1724 = vadd.f32 %v1565, %v1723
        %1725 = vmatprep.mubr.bf16.mxu0 0
        %1726 = vmatmul.mubr.bf16.gmra.mrb[0].mxu0 %v1606
        %v1727 = vpop.f32.mrb[0].mxu0
        %v1728 = vadd.f32 %v1561, %v1727
        %v1729 = vpop.f32.mrb[0].mxu0
        %v1730 = vadd.f32 %v1565, %v1729
        %v1731 = vpop.f32.mrb[0].mxu0
        %v1732 = vadd.f32 %v1561, %v1731
        %v1733 = vpop.f32.mrb[0].mxu0
        %v1734 = vadd.f32 %v1565, %v1733
        %1735 = vmatprep.mubr.bf16.mxu0 0
        %1736 = vmatmul.mubr.bf16.gmra.mrb[0].mxu0 %v1608
        %v1737 = vpop.f32.mrb[0].mxu0
        %v1738 = vadd.f32 %v1561, %v1737
        %v1739 = vpop.f32.mrb[0].mxu0
        %v1740 = vadd.f32 %v1565, %v1739
        %v1741 = vpop.f32.mrb[0].mxu0
        %v1742 = vadd.f32 %v1561, %v1741
        %v1743 = vpop.f32.mrb[0].mxu0
        %v1744 = vadd.f32 %v1565, %v1743
        %1745 = vmatprep.mubr.bf16.mxu0 0
        %1746 = vmatmul.mubr.bf16.gmra.mrb[0].mxu0 %v1610
        %v1747 = vpop.f32.mrb[0].mxu0
        %v1748 = vadd.f32 %v1561, %v1747
        %v1749 = vpop.f32.mrb[0].mxu0
        %v1750 = vadd.f32 %v1565, %v1749
        %v1751 = vpop.f32.mrb[0].mxu0
        %v1752 = vadd.f32 %v1561, %v1751
        %v1753 = vpop.f32.mrb[0].mxu0
        %v1754 = vadd.f32 %v1565, %v1753
        %1755 = vmatprep.mubr.bf16.mxu0 0
        %1756 = vmatmul.mubr.bf16.gmra.mrb[0].mxu0 %v1612
        %v1757 = vpop.f32.mrb[0].mxu0
        %v1758 = vadd.f32 %v1561, %v1757
        %v1759 = vpop.f32.mrb[0].mxu0
        %v1760 = vadd.f32 %v1565, %v1759
        %v1761 = vpop.f32.mrb[0].mxu0
        %v1762 = vadd.f32 %v1561, %v1761
        %v1763 = vpop.f32.mrb[0].mxu0
        %v1764 = vadd.f32 %v1565, %v1763
        %1765 = vmatprep.mubr.bf16.mxu0 0
        %1766 = vmatmul.mubr.bf16.gmra.mrb[0].mxu0 %v1614
        %v1767 = vpop.f32.mrb[0].mxu0
        %v1768 = vadd.f32 %v1561, %v1767
        %v1769 = vpop.f32.mrb[0].mxu0
        %v1770 = vadd.f32 %v1565, %v1769
        %v1771 = vpop.f32.mrb[0].mxu0
        %v1772 = vadd.f32 %v1561, %v1771
        %v1773 = vpop.f32.mrb[0].mxu0
        %v1774 = vadd.f32 %v1565, %v1773
        %1775 = vmatprep.mubr.bf16.mxu0 0
        %1776 = vmatmul.mubr.bf16.gmra.mrb[0].mxu0 %v1616
        %v1777 = vpop.f32.mrb[0].mxu0
        %v1778 = vadd.f32 %v1561, %v1777
        %v1779 = vpop.f32.mrb[0].mxu0
        %v1780 = vadd.f32 %v1565, %v1779
        %v1781 = vpop.f32.mrb[0].mxu0
        %v1782 = vadd.f32 %v1561, %v1781
        %v1783 = vpop.f32.mrb[0].mxu0
        %v1784 = vadd.f32 %v1565, %v1783
        %1785 = vmatprep.mubr.bf16.mxu0 0
        %1786 = vmatmul.mubr.bf16.gmra.mrb[0].mxu0 %v1618
        %v1787 = vpop.f32.mrb[0].mxu0
        %v1788 = vadd.f32 %v1561, %v1787
        %v1789 = vpop.f32.mrb[0].mxu0
        %v1790 = vadd.f32 %v1565, %v1789
        %v1791 = vpop.f32.mrb[0].mxu0
        %v1792 = vadd.f32 %v1561, %v1791
        %v1793 = vpop.f32.mrb[0].mxu0
        %v1794 = vadd.f32 %v1565, %v1793
        %1795 = vmatprep.mubr.bf16.mxu0 0
        %1796 = vmatmul.mubr.bf16.gmra.mrb[0].mxu0 %v1620
        %v1797 = vpop.f32.mrb[0].mxu0
        %v1798 = vadd.f32 %v1561, %v1797
        %v1799 = vpop.f32.mrb[0].mxu0
        %v1800 = vadd.f32 %v1565, %v1799
        %v1801 = vpop.f32.mrb[0].mxu0
        %v1802 = vadd.f32 %v1561, %v1801
        %v1803 = vpop.f32.mrb[0].mxu0
        %v1804 = vadd.f32 %v1565, %v1803
        %1805 = vmatprep.mubr.bf16.mxu0 0
        %1806 = vmatmul.mubr.bf16.gmra.mrb[0].mxu0 %v1622
        %v1807 = vpop.f32.mrb[0].mxu0
        %v1808 = vadd.f32 %v1561, %v1807
        %v1809 = vpop.f32.mrb[0].mxu0
        %v1810 = vadd.f32 %v1565, %v1809
        %v1811 = vpop.f32.mrb[0].mxu0
        %v1812 = vadd.f32 %v1561, %v1811
        %v1813 = vpop.f32.mrb[0].mxu0
        %v1814 = vadd.f32 %v1565, %v1813
        %1815 = vmatprep.mubr.bf16.mxu0 0
        %1816 = vmatmul.mubr.bf16.gmra.mrb[0].mxu0 %v1624
        %v1817 = vpop.f32.mrb[0].mxu0
        %v1818 = vadd.f32 %v1561, %v1817
        %v1819 = vpop.f32.mrb[0].mxu0
        %v1820 = vadd.f32 %v1565, %v1819
        %v1821 = vpop.f32.mrb[0].mxu0
        %v1822 = vadd.f32 %v1561, %v1821
        %v1823 = vpop.f32.mrb[0].mxu0
        %v1824 = vadd.f32 %v1565, %v1823
        %1825 = vdwg.mxu0
        %v1826 = vmax.f32 %v1668, 0.0
        %v1827 = vmax.f32 %v1670, 0.0
        %v1828 = vmax.f32 %v1672, 0.0
        %v1829 = vmax.f32 %v1674, 0.0
        %v1830 = vmax.f32 %v1678, 0.0
        %v1831 = vmax.f32 %v1680, 0.0
        %v1832 = vmax.f32 %v1682, 0.0
        %v1833 = vmax.f32 %v1684, 0.0
        %v1834 = vmax.f32 %v1688, 0.0
        %v1835 = vmax.f32 %v1690, 0.0
        %v1836 = vmax.f32 %v1692, 0.0
        %v1837 = vmax.f32 %v1694, 0.0
        %v1838 = vmax.f32 %v1698, 0.0
        %v1839 = vmax.f32 %v1700, 0.0
        %v1840 = vmax.f32 %v1702, 0.0
        %v1841 = vmax.f32 %v1704, 0.0
        %v1842 = vmax.f32 %v1708, 0.0
        %v1843 = vmax.f32 %v1710, 0.0
        %v1844 = vmax.f32 %v1712, 0.0
        %v1845 = vmax.f32 %v1714, 0.0
        %v1846 = vmax.f32 %v1718, 0.0
        %v1847 = vmax.f32 %v1720, 0.0
        %v1848 = vmax.f32 %v1722, 0.0
        %v1849 = vmax.f32 %v1724, 0.0
        %v1850 = vmax.f32 %v1728, 0.0
        %v1851 = vmax.f32 %v1730, 0.0
        %v1852 = vmax.f32 %v1732, 0.0
        %v1853 = vmax.f32 %v1734, 0.0
        %v1854 = vmax.f32 %v1738, 0.0
        %v1855 = vmax.f32 %v1740, 0.0
        %v1856 = vmax.f32 %v1742, 0.0
        %v1857 = vmax.f32 %v1744, 0.0
        %v1858 = vmax.f32 %v1748, 0.0
        %v1859 = vmax.f32 %v1750, 0.0
        %v1860 = vmax.f32 %v1752, 0.0
        %v1861 = vmax.f32 %v1754, 0.0
        %v1862 = vmax.f32 %v1758, 0.0
        %v1863 = vmax.f32 %v1760, 0.0
        %v1864 = vmax.f32 %v1762, 0.0
        %v1865 = vmax.f32 %v1764, 0.0
        %v1866 = vmax.f32 %v1768, 0.0
        %v1867 = vmax.f32 %v1770, 0.0
        %v1868 = vmax.f32 %v1772, 0.0
        %v1869 = vmax.f32 %v1774, 0.0
        %v1870 = vmax.f32 %v1778, 0.0
        %v1871 = vmax.f32 %v1780, 0.0
        %v1872 = vmax.f32 %v1782, 0.0
        %v1873 = vmax.f32 %v1784, 0.0
        %v1874 = vmax.f32 %v1788, 0.0
        %v1875 = vmax.f32 %v1790, 0.0
        %v1876 = vmax.f32 %v1792, 0.0
        %v1877 = vmax.f32 %v1794, 0.0
        %v1878 = vmax.f32 %v1798, 0.0
        %v1879 = vmax.f32 %v1800, 0.0
        %v1880 = vmax.f32 %v1802, 0.0
        %v1881 = vmax.f32 %v1804, 0.0
        %v1882 = vmax.f32 %v1808, 0.0
        %v1883 = vmax.f32 %v1810, 0.0
        %v1884 = vmax.f32 %v1812, 0.0
        %v1885 = vmax.f32 %v1814, 0.0
        %v1886 = vmax.f32 %v1818, 0.0
        %v1887 = vmax.f32 %v1820, 0.0
        %v1888 = vmax.f32 %v1822, 0.0
        %v1889 = vmax.f32 %v1824, 0.0
        %1890 = vst [vmem:[%s177] sm:$0xff] %v1826
        %1891 = vst [vmem:[%s177 + $0x8] sm:$0xff] %v1827
        %1892 = vst [vmem:[%s177 + $0x10] sm:$0xff] %v1828
        %1893 = vst [vmem:[%s177 + $0x18] sm:$0xff] %v1829
        %1894 = vst [vmem:[%s177 + $0x20] sm:$0xff] %v1830
        %1895 = vst [vmem:[%s177 + $0x28] sm:$0xff] %v1831
        %1896 = vst [vmem:[%s177 + $0x30] sm:$0xff] %v1832
        %1897 = vst [vmem:[%s177 + $0x38] sm:$0xff] %v1833
        %1898 = vst [vmem:[%s177 + $0x40] sm:$0xff] %v1834
        %1899 = vst [vmem:[%s177 + $0x48] sm:$0xff] %v1835
        %1900 = vst [vmem:[%s177 + $0x50] sm:$0xff] %v1836
        %1901 = vst [vmem:[%s177 + $0x58] sm:$0xff] %v1837
        %1902 = vst [vmem:[%s177 + $0x60] sm:$0xff] %v1838
        %1903 = vst [vmem:[%s177 + $0x68] sm:$0xff] %v1839
        %1904 = vst [vmem:[%s177 + $0x70] sm:$0xff] %v1840
        %1905 = vst [vmem:[%s177 + $0x78] sm:$0xff] %v1841
        %1906 = vst [vmem:[%s177 + $0x80] sm:$0xff] %v1842
        %1907 = vst [vmem:[%s177 + $0x88] sm:$0xff] %v1843
        %1908 = vst [vmem:[%s177 + $0x90] sm:$0xff] %v1844
        %1909 = vst [vmem:[%s177 + $0x98] sm:$0xff] %v1845
        %1910 = vst [vmem:[%s177 + $0xa0] sm:$0xff] %v1846
        %1911 = vst [vmem:[%s177 + $0xa8] sm:$0xff] %v1847
        %1912 = vst [vmem:[%s177 + $0xb0] sm:$0xff] %v1848
        %1913 = vst [vmem:[%s177 + $0xb8] sm:$0xff] %v1849
        %1914 = vst [vmem:[%s177 + $0xc0] sm:$0xff] %v1850
        %1915 = vst [vmem:[%s177 + $0xc8] sm:$0xff] %v1851
        %1916 = vst [vmem:[%s177 + $0xd0] sm:$0xff] %v1852
        %1917 = vst [vmem:[%s177 + $0xd8] sm:$0xff] %v1853
        %1918 = vst [vmem:[%s177 + $0xe0] sm:$0xff] %v1854
        %1919 = vst [vmem:[%s177 + $0xe8] sm:$0xff] %v1855
        %1920 = vst [vmem:[%s177 + $0xf0] sm:$0xff] %v1856
        %1921 = vst [vmem:[%s177 + $0xf8] sm:$0xff] %v1857
        %1922 = vst [vmem:[%s177 + $0x100] sm:$0xff] %v1858
        %1923 = vst [vmem:[%s177 + $0x108] sm:$0xff] %v1859
        %1924 = vst [vmem:[%s177 + $0x110] sm:$0xff] %v1860
        %1925 = vst [vmem:[%s177 + $0x118] sm:$0xff] %v1861
        %1926 = vst [vmem:[%s177 + $0x120] sm:$0xff] %v1862
        %1927 = vst [vmem:[%s177 + $0x128] sm:$0xff] %v1863
        %1928 = vst [vmem:[%s177 + $0x130] sm:$0xff] %v1864
        %1929 = vst [vmem:[%s177 + $0x138] sm:$0xff] %v1865
        %1930 = vst [vmem:[%s177 + $0x140] sm:$0xff] %v1866
        %1931 = vst [vmem:[%s177 + $0x148] sm:$0xff] %v1867
        %1932 = vst [vmem:[%s177 + $0x150] sm:$0xff] %v1868
        %1933 = vst [vmem:[%s177 + $0x158] sm:$0xff] %v1869
        %1934 = vst [vmem:[%s177 + $0x160] sm:$0xff] %v1870
        %1935 = vst [vmem:[%s177 + $0x168] sm:$0xff] %v1871
        %1936 = vst [vmem:[%s177 + $0x170] sm:$0xff] %v1872
        %1937 = vst [vmem:[%s177 + $0x178] sm:$0xff] %v1873
        %1938 = vst [vmem:[%s177 + $0x180] sm:$0xff] %v1874
        %1939 = vst [vmem:[%s177 + $0x188] sm:$0xff] %v1875
        %1940 = vst [vmem:[%s177 + $0x190] sm:$0xff] %v1876
        %1941 = vst [vmem:[%s177 + $0x198] sm:$0xff] %v1877
        %1942 = vst [vmem:[%s177 + $0x1a0] sm:$0xff] %v1878
        %1943 = vst [vmem:[%s177 + $0x1a8] sm:$0xff] %v1879
        %1944 = vst [vmem:[%s177 + $0x1b0] sm:$0xff] %v1880
        %1945 = vst [vmem:[%s177 + $0x1b8] sm:$0xff] %v1881
        %1946 = vst [vmem:[%s177 + $0x1c0] sm:$0xff] %v1882
        %1947 = vst [vmem:[%s177 + $0x1c8] sm:$0xff] %v1883
        %1948 = vst [vmem:[%s177 + $0x1d0] sm:$0xff] %v1884
        %1949 = vst [vmem:[%s177 + $0x1d8] sm:$0xff] %v1885
        %1950 = vst [vmem:[%s177 + $0x1e0] sm:$0xff] %v1886
        %1951 = vst [vmem:[%s177 + $0x1e8] sm:$0xff] %v1887
        %1952 = vst [vmem:[%s177 + $0x1f0] sm:$0xff] %v1888
        %1953 = vst [vmem:[%s177 + $0x1f8] sm:$0xff] %v1889
        %s1954 = sand.u32 %s107, 1
        %s1955 = scalar_lea.sflag [#allocation3], %s1954
        %s1956 = sand.u32 %s107, 1
        %s1957 = smul.addr %s1956, 512
        %s1958 = scalar_lea.vmem [#allocation2], %s1957
        // Predicated region
        $region33: #{tpu_custom_call.1} parent=31 // pred_check
          %p1959 = pneg %p117
        $region34: #{tpu_custom_call.1} parent=31 // pred_check_branch
          %1961 = sbr.rel (%p1959) target = $region36
        $region35: #{tpu_custom_call.1} parent=31 // pred_region
          %s1962 = smul.u32 32, %s22
          %s1964 = ssub.s32 8192, 8192
          %1965 = vsyncadd %s1955, %s1964
          %s1966 = smul.addr %s1962, 2
          %s1967 = smul.addr %s21, 64
          %s1968 = sadd.s32 %s1966, %s1967
          %s1969 = smul.addr %s1968, 128
          %s1970 = scalar_lea.hbm %s3, %s1969
          %s1971 = sshll.u32 %s1958, 4
          %s1972 = int_to_ptr.vmem [resolvable:$true] %s1971
          %1977 = dma.vmem_to_hbm [thread:$0]  %s1972, 8192, %s1970, %s1955, 256, 256, 16
        $region36: #{tpu_custom_call.1} parent=31 // pred_fallthru
          _
      $region32: #{tpu_custom_call.1} parent=5 // pred_fallthru
        _
      %p1978 = scmp.le.s32.totalorder 2, %s12
      // Predicated region
      $region37: #{tpu_custom_call.1} parent=5 // pred_check
        %p1979 = pneg %p1978
      $region38: #{tpu_custom_call.1} parent=5 // pred_check_branch
        %1981 = sbr.rel (%p1979) target = $region40
      $region39: #{tpu_custom_call.1} parent=5 // pred_region
        %s1982 = ssub.s32 %s12, 2
        // Predicated region
        $region41: #{tpu_custom_call.1} parent=39 // pred_check
          %p1983 = pneg %p123
        $region42: #{tpu_custom_call.1} parent=39 // pred_check_branch
          %1985 = sbr.rel (%p1983) target = $region44
        $region43: #{tpu_custom_call.1} parent=39 // pred_region
          %s1986 = sand.u32 %s108, 1
          %s1987 = scalar_lea.sflag [#allocation3], %s1986
          %s1988 = sand.u32 %s108, 1
          %s1989 = smul.addr %s1988, 512
          %s1990 = scalar_lea.vmem [#allocation2], %s1989
          %1991 = dma.done %s1987, 8192
        $region44: #{tpu_custom_call.1} parent=39 // pred_fallthru
          _
      $region40: #{tpu_custom_call.1} parent=5 // pred_fallthru
        _
    $region6: #{tpu_custom_call.1} parent=1 // loop_footer
      %s16 = sadd.s32 1, %s12
    $region7: #{tpu_custom_call.1} parent=1 // loop_footer_branch
      %11 = sbr.rel target = $region3
    $region8: #{tpu_custom_call.1} parent=1 // loop_exit
      _
    %1992 = vsyncpa [#allocation3], 1
    %s1993 = scalar_lea.sflag [#allocation3], 1
    %1994 = vsyncpa %s1993, 1

</llo_original>
